<compile_context>
chip_gen: v7x
topology: tpu7x:2x2x1
jax: 0.10.0
libtpu: 0.0.40
codegen_flags: <defaults>
</compile_context>

<pallas_src>
import jax
import jax.numpy as jnp
from jax.experimental import pallas as pl
from jax.experimental.pallas import tpu as pltpu


def _head_kernel(x_ref, ws_ref, wh_ref, bs_ref, bh_ref, out_ref):
    # x_ref : (Bt, C, HW)    channels on sublanes, spatial on lanes
    # ws_ref: (C, hidden)    shared FC weight                (resident)
    # wh_ref: (hidden, 128)  fused+padded head weight dr|dme (resident)
    # bs_ref: (1, hidden)    shared FC bias                  (resident)
    # bh_ref: (1, 128)       fused+padded head bias          (resident)
    x = x_ref[...]                                   # (Bt, C, HW)
    pooled = jnp.mean(x, axis=-1)                    # (Bt, C) global average pool

    # Shared FC + ReLU (MXU matmul, f32 accumulation).
    h = jnp.dot(pooled, ws_ref[...],
                preferred_element_type=jnp.float32) + bs_ref[...]   # (Bt, hidden)
    h = jnp.maximum(h, 0.0)

    # Dropout: inference mode -> identity.

    # Fused DR+DME head matmul, lane-dense padded output slab.
    out_ref[...] = jnp.dot(h, wh_ref[...],
                           preferred_element_type=jnp.float32) + bh_ref[...]


def _pick_batch_tile(B, C, HW, n_pad, resident_bytes, itemsize=4):
    """Largest batch tile that fits a conservative (all-generation) VMEM budget."""
    budget = 48 << 20                                  # fits v7x 64 MiB; v5e/v6e 128 MiB
    per_row = (2 * C * HW + 2 * n_pad) * itemsize      # double-buffered x + out, per sample
    cap = max(int((budget - resident_bytes) // per_row), 8)
    cap = min(cap, 256)                                # MXU row count (v6e/v7x); 2x128 on v5e
    if B <= cap:
        if B >= 16:
            # Keep >= 2 grid steps so the "parallel" batch axis can shard
            # across the 2 TensorCores on v7x.
            half = -(-B // 2)
            return int(min(cap, -(-half // 8) * 8))
        return int(B)                                  # single full-batch block
    return int(max((cap // 8) * 8, 8))                 # multiple of 8 (sublane granule)


def classification_head(x_nchw, params):
    """x_nchw: (B, C, H, W) float32 — matches the PyTorch NCHW convention."""
    B, C, H, W = x_nchw.shape
    HW = H * W
    # Pure reshape (no transpose / no extra HBM traffic): (B, C, H*W).
    x = x_nchw.reshape(B, C, HW)

    ws, bs = params["w_shared"], params["b_shared"]        # (C, 512), (1, 512)
    wdr, bdr = params["w_dr"], params["b_dr"]              # (512, 5), (1, 5)
    wdme, bdme = params["w_dme"], params["b_dme"]          # (512, 3), (1, 3)

    hidden = ws.shape[1]
    n_dr = wdr.shape[1]
    n_dme = wdme.shape[1]
    n_out = n_dr + n_dme
    n_pad = 128                                            # lane-dense head output

    # Fuse the two heads into one zero-padded (hidden, 128) weight + bias.
    wh = jnp.zeros((hidden, n_pad), jnp.float32)
    wh = wh.at[:, :n_dr].set(wdr).at[:, n_dr:n_out].set(wdme)
    bh = jnp.zeros((1, n_pad), jnp.float32)
    bh = bh.at[:, :n_dr].set(bdr).at[:, n_dr:n_out].set(bdme)

    itemsize = 4
    resident_bytes = (C * hidden + hidden * n_pad + hidden + n_pad) * itemsize
    Bt = _pick_batch_tile(B, C, HW, n_pad, resident_bytes, itemsize)
    grid = (pl.cdiv(B, Bt),)

    # Explicit scoped-VMEM limit (v5e default is only 16 MiB); stays under
    # v7x's 64 MiB physical VMEM.
    needed = (2 * Bt * C * HW + 2 * Bt * n_pad) * itemsize + 2 * resident_bytes
    vmem_limit = int(min(56 << 20, max(32 << 20, needed + (4 << 20))))

    # Advisory cost estimate so XLA can overlap this small call with the backbone.
    flops = 2 * B * (C * hidden + hidden * n_pad) + B * C * HW
    bytes_accessed = (B * C * HW + B * n_pad) * itemsize + resident_bytes
    cost = pl.CostEstimate(flops=flops, transcendentals=0,
                           bytes_accessed=bytes_accessed)

    def run(single_buffer_weights):
        def res_spec(shape):
            idx_map = lambda i: (0,) * len(shape)
            if single_buffer_weights:
                # Constant index_map -> second pipeline buffer is pure waste.
                return pl.BlockSpec(shape, idx_map, pipeline_mode=pl.Buffered(1))
            return pl.BlockSpec(shape, idx_map)

        return pl.pallas_call(
            _head_kernel,
            out_shape=jax.ShapeDtypeStruct((B, n_pad), jnp.float32),
            grid_spec=pltpu.PrefetchScalarGridSpec(
                num_scalar_prefetch=0,
                grid=grid,
                in_specs=[
                    pl.BlockSpec((Bt, C, HW), lambda i: (i, 0, 0)),   # streamed x
                    res_spec((C, hidden)),                            # w_shared
                    res_spec((hidden, n_pad)),                        # fused head weight
                    res_spec((1, hidden)),                            # b_shared
                    res_spec((1, n_pad)),                             # fused head bias
                ],
                out_specs=pl.BlockSpec((Bt, n_pad), lambda i: (i, 0)),
            ),
            compiler_params=pltpu.CompilerParams(
                dimension_semantics=("parallel",),
                vmem_limit_bytes=vmem_limit),
            cost_estimate=cost,
        )(x, ws, wh, bs, bh)

    try:
        out = run(True)
    except Exception:
        # Fallback: identical kernel with default (double) buffering on the
        # resident weights, in case this JAX build rejects pl.Buffered(1).
        out = run(False)

    return {"dr_logits": out[:, :n_dr], "dme_logits": out[:, n_dr:n_out]}


def init_params(key, feature_dim=256, hidden=512, num_classes_dr=5, num_classes_dme=3):
    """Deterministic init mimicking PyTorch nn.Linear default (U[-1/sqrt(fan_in), +])."""
    ks = jax.random.split(key, 6)

    def lin(kw, kb, fan_in, fan_out):
        bound = 1.0 / jnp.sqrt(float(fan_in))
        w = jax.random.uniform(kw, (fan_in, fan_out), jnp.float32, -bound, bound)
        b = jax.random.uniform(kb, (1, fan_out), jnp.float32, -bound, bound)
        return w, b

    w_shared, b_shared = lin(ks[0], ks[1], feature_dim, hidden)
    w_dr, b_dr = lin(ks[2], ks[3], hidden, num_classes_dr)
    w_dme, b_dme = lin(ks[4], ks[5], hidden, num_classes_dme)
    return {
        "w_shared": w_shared, "b_shared": b_shared,
        "w_dr": w_dr, "b_dr": b_dr,
        "w_dme": w_dme, "b_dme": b_dme,
    }


def _reference(x_nchw, params):
    """Pure-JAX reference for correctness check."""
    pooled = jnp.mean(x_nchw, axis=(2, 3))                    # (B, C)
    h = jnp.maximum(pooled @ params["w_shared"] + params["b_shared"], 0.0)
    dr = h @ params["w_dr"] + params["b_dr"]
    dme = h @ params["w_dme"] + params["b_dme"]
    return {"dr_logits": dr, "dme_logits": dme}


if __name__ == "__main__":
    key = jax.random.PRNGKey(0)
    k_x, k_p = jax.random.split(key)

    B, C, H, W = 2, 256, 8, 8          # small shapes: batch=2, feature_dim=256, 8x8 spatial
    x = jax.random.normal(k_x, (B, C, H, W), jnp.float32)
    params = init_params(k_p, feature_dim=C)

    out = classification_head(x, params)
    jax.block_until_ready(out)

    ref = _reference(x, params)
    assert jnp.allclose(out["dr_logits"], ref["dr_logits"], atol=1e-4, rtol=1e-4)
    assert jnp.allclose(out["dme_logits"], ref["dme_logits"], atol=1e-4, rtol=1e-4)
    assert out["dr_logits"].shape == (B, 5)
    assert out["dme_logits"].shape == (B, 3)

    print("KERNEL_OK")
</pallas_src>

<mosaic_0001>
module attributes {stable_mosaic.version = 11 : i64} {
  func.func @_head_kernel(%arg0: i32, %arg1: memref<2x256x64xf32, #tpu.memory_space<vmem>>, %arg2: memref<256x512xf32, #tpu.memory_space<vmem>>, %arg3: memref<512x128xf32, #tpu.memory_space<vmem>>, %arg4: memref<1x512xf32, #tpu.memory_space<vmem>>, %arg5: memref<1x128xf32, #tpu.memory_space<vmem>>, %arg6: memref<2x128xf32, #tpu.memory_space<vmem>>) attributes {dimension_semantics = [#tpu.dimension_semantics<parallel>], iteration_bounds = array<i64: 1>, scalar_prefetch = 0 : i64, scratch_operands = 0 : i64, tpu.core_type = #tpu.core_type<tc>, window_params = [{transform_indices = @transform_0, window_bounds = array<i64: 2, 256, 64>}, {pipeline_mode = #tpu.pipeline_mode<synchronous>, transform_indices = @transform_1, window_bounds = array<i64: 256, 512>}, {pipeline_mode = #tpu.pipeline_mode<synchronous>, transform_indices = @transform_2, window_bounds = array<i64: 512, 128>}, {pipeline_mode = #tpu.pipeline_mode<synchronous>, transform_indices = @transform_3, window_bounds = array<i64: 1, 512>}, {pipeline_mode = #tpu.pipeline_mode<synchronous>, transform_indices = @transform_4, window_bounds = array<i64: 1, 128>}, {transform_indices = @transform_5, window_bounds = array<i64: 2, 128>}]} {
    %c0 = arith.constant 0 : index
    %c0_0 = arith.constant 0 : index
    %c0_1 = arith.constant 0 : index
    %0 = vector.load %arg1[%c0, %c0_0, %c0_1] : memref<2x256x64xf32, #tpu.memory_space<vmem>>, vector<2x256x64xf32>
    %cst = arith.constant dense<0.000000e+00> : vector<2x256xf32>
    %1 = vector.multi_reduction <add>, %0, %cst [2] : vector<2x256x64xf32> to vector<2x256xf32>
    %cst_2 = arith.constant 6.400000e+01 : f32
    %2 = vector.broadcast %cst_2 : f32 to vector<2x256xf32>
    %3 = arith.divf %1, %2 : vector<2x256xf32>
    %c0_3 = arith.constant 0 : index
    %c0_4 = arith.constant 0 : index
    %4 = vector.load %arg2[%c0_3, %c0_4] : memref<256x512xf32, #tpu.memory_space<vmem>>, vector<256x512xf32>
    %cst_5 = arith.constant dense<0.000000e+00> : vector<2x512xf32>
    %5 = tpu.matmul %3, %4, %cst_5 {dimension_numbers = #tpu.dot_dimension_numbers<[1], [0], [0], [1], [0, 0, 1, 1], [], []>} : vector<2x256xf32>, vector<256x512xf32>, vector<2x512xf32> -> vector<2x512xf32>
    %c0_6 = arith.constant 0 : index
    %c0_7 = arith.constant 0 : index
    %6 = vector.load %arg4[%c0_6, %c0_7] : memref<1x512xf32, #tpu.memory_space<vmem>>, vector<1x512xf32>
    %7 = vector.broadcast %6 : vector<1x512xf32> to vector<2x512xf32>
    %8 = arith.addf %5, %7 : vector<2x512xf32>
    %cst_8 = arith.constant 0.000000e+00 : f32
    %9 = vector.broadcast %cst_8 : f32 to vector<2x512xf32>
    %10 = arith.maximumf %8, %9 : vector<2x512xf32>
    %c0_9 = arith.constant 0 : index
    %c0_10 = arith.constant 0 : index
    %11 = vector.load %arg3[%c0_9, %c0_10] : memref<512x128xf32, #tpu.memory_space<vmem>>, vector<512x128xf32>
    %cst_11 = arith.constant dense<0.000000e+00> : vector<2x128xf32>
    %12 = tpu.matmul %10, %11, %cst_11 {dimension_numbers = #tpu.dot_dimension_numbers<[1], [0], [0], [1], [0, 0, 1, 1], [], []>} : vector<2x512xf32>, vector<512x128xf32>, vector<2x128xf32> -> vector<2x128xf32>
    %c0_12 = arith.constant 0 : index
    %c0_13 = arith.constant 0 : index
    %13 = vector.load %arg5[%c0_12, %c0_13] : memref<1x128xf32, #tpu.memory_space<vmem>>, vector<1x128xf32>
    %14 = vector.broadcast %13 : vector<1x128xf32> to vector<2x128xf32>
    %15 = arith.addf %12, %14 : vector<2x128xf32>
    %c0_14 = arith.constant 0 : index
    %c0_15 = arith.constant 0 : index
    %16 = vector.load %arg6[%c0_14, %c0_15] : memref<2x128xf32, #tpu.memory_space<vmem>>, vector<2x128xf32>
    tpu.vector_store %arg6[%c0_14, %c0_15], %15 {strides = array<i32>} : memref<2x128xf32, #tpu.memory_space<vmem>>, vector<2x128xf32>,
    return
  }
  func.func @transform_0(%arg0: i32) -> (i32, i32, i32) {
    %c0_i32 = arith.constant 0 : i32
    %c0_i32_0 = arith.constant 0 : i32
    %c0_i32_1 = arith.constant 0 : i32
    return %arg0, %c0_i32, %c0_i32_0 : i32, i32, i32
  }
  func.func @transform_1(%arg0: i32) -> (i32, i32) {
    %c0_i32 = arith.constant 0 : i32
    %c0_i32_0 = arith.constant 0 : i32
    %c0_i32_1 = arith.constant 0 : i32
    return %c0_i32, %c0_i32_0 : i32, i32
  }
  func.func @transform_2(%arg0: i32) -> (i32, i32) {
    %c0_i32 = arith.constant 0 : i32
    %c0_i32_0 = arith.constant 0 : i32
    %c0_i32_1 = arith.constant 0 : i32
    return %c0_i32, %c0_i32_0 : i32, i32
  }
  func.func @transform_3(%arg0: i32) -> (i32, i32) {
    %c0_i32 = arith.constant 0 : i32
    %c0_i32_0 = arith.constant 0 : i32
    %c0_i32_1 = arith.constant 0 : i32
    return %c0_i32, %c0_i32_0 : i32, i32
  }
  func.func @transform_4(%arg0: i32) -> (i32, i32) {
    %c0_i32 = arith.constant 0 : i32
    %c0_i32_0 = arith.constant 0 : i32
    %c0_i32_1 = arith.constant 0 : i32
    return %c0_i32, %c0_i32_0 : i32, i32
  }
  func.func @transform_5(%arg0: i32) -> (i32, i32) {
    %c0_i32 = arith.constant 0 : i32
    %c0_i32_0 = arith.constant 0 : i32
    return %arg0, %c0_i32 : i32, i32
  }
}

module attributes {stable_mosaic.version = 11 : i64} {
  func.func @_head_kernel(%arg0: i32, %arg1: memref<2x256x64xf32, #tpu.memory_space<vmem>>, %arg2: memref<256x512xf32, #tpu.memory_space<vmem>>, %arg3: memref<512x128xf32, #tpu.memory_space<vmem>>, %arg4: memref<1x512xf32, #tpu.memory_space<vmem>>, %arg5: memref<1x128xf32, #tpu.memory_space<vmem>>, %arg6: memref<2x128xf32, #tpu.memory_space<vmem>>) attributes {dimension_semantics = [#tpu.dimension_semantics<parallel>], iteration_bounds = array<i64: 1>, scalar_prefetch = 0 : i64, scratch_operands = 0 : i64, tpu.core_type = #tpu.core_type<tc>, window_params = [{transform_indices = @transform_0, window_bounds = array<i64: 2, 256, 64>}, {pipeline_mode = #tpu.pipeline_mode<synchronous>, transform_indices = @transform_1, window_bounds = array<i64: 256, 512>}, {pipeline_mode = #tpu.pipeline_mode<synchronous>, transform_indices = @transform_2, window_bounds = array<i64: 512, 128>}, {pipeline_mode = #tpu.pipeline_mode<synchronous>, transform_indices = @transform_3, window_bounds = array<i64: 1, 512>}, {pipeline_mode = #tpu.pipeline_mode<synchronous>, transform_indices = @transform_4, window_bounds = array<i64: 1, 128>}, {transform_indices = @transform_5, window_bounds = array<i64: 2, 128>}]} {
    %c0 = arith.constant 0 : index
    %c0_0 = arith.constant 0 : index
    %c0_1 = arith.constant 0 : index
    %0 = vector.load %arg1[%c0, %c0_0, %c0_1] : memref<2x256x64xf32, #tpu.memory_space<vmem>>, vector<2x256x64xf32>
    %cst = arith.constant dense<0.000000e+00> : vector<2x256xf32>
    %1 = vector.multi_reduction <add>, %0, %cst [2] : vector<2x256x64xf32> to vector<2x256xf32>
    %cst_2 = arith.constant 6.400000e+01 : f32
    %2 = vector.broadcast %cst_2 : f32 to vector<2x256xf32>
    %3 = arith.divf %1, %2 : vector<2x256xf32>
    %c0_3 = arith.constant 0 : index
    %c0_4 = arith.constant 0 : index
    %4 = vector.load %arg2[%c0_3, %c0_4] : memref<256x512xf32, #tpu.memory_space<vmem>>, vector<256x512xf32>
    %cst_5 = arith.constant dense<0.000000e+00> : vector<2x512xf32>
    %5 = tpu.matmul %3, %4, %cst_5 {dimension_numbers = #tpu.dot_dimension_numbers<[1], [0], [0], [1], [0, 0, 1, 1], [], []>} : vector<2x256xf32>, vector<256x512xf32>, vector<2x512xf32> -> vector<2x512xf32>
    %c0_6 = arith.constant 0 : index
    %c0_7 = arith.constant 0 : index
    %6 = vector.load %arg4[%c0_6, %c0_7] : memref<1x512xf32, #tpu.memory_space<vmem>>, vector<1x512xf32>
    %7 = vector.broadcast %6 : vector<1x512xf32> to vector<2x512xf32>
    %8 = arith.addf %5, %7 : vector<2x512xf32>
    %cst_8 = arith.constant 0.000000e+00 : f32
    %9 = vector.broadcast %cst_8 : f32 to vector<2x512xf32>
    %10 = arith.maximumf %8, %9 : vector<2x512xf32>
    %c0_9 = arith.constant 0 : index
    %c0_10 = arith.constant 0 : index
    %11 = vector.load %arg3[%c0_9, %c0_10] : memref<512x128xf32, #tpu.memory_space<vmem>>, vector<512x128xf32>
    %cst_11 = arith.constant dense<0.000000e+00> : vector<2x128xf32>
    %12 = tpu.matmul %10, %11, %cst_11 {dimension_numbers = #tpu.dot_dimension_numbers<[1], [0], [0], [1], [0, 0, 1, 1], [], []>} : vector<2x512xf32>, vector<512x128xf32>, vector<2x128xf32> -> vector<2x128xf32>
    %c0_12 = arith.constant 0 : index
    %c0_13 = arith.constant 0 : index
    %13 = vector.load %arg5[%c0_12, %c0_13] : memref<1x128xf32, #tpu.memory_space<vmem>>, vector<1x128xf32>
    %14 = vector.broadcast %13 : vector<1x128xf32> to vector<2x128xf32>
    %15 = arith.addf %12, %14 : vector<2x128xf32>
    %c0_14 = arith.constant 0 : index
    %c0_15 = arith.constant 0 : index
    %16 = vector.load %arg6[%c0_14, %c0_15] : memref<2x128xf32, #tpu.memory_space<vmem>>, vector<2x128xf32>
    tpu.vector_store %arg6[%c0_14, %c0_15], %15 {strides = array<i32>} : memref<2x128xf32, #tpu.memory_space<vmem>>, vector<2x128xf32>,
    return
  }
  func.func @transform_0(%arg0: i32) -> (i32, i32, i32) {
    %c0_i32 = arith.constant 0 : i32
    %c0_i32_0 = arith.constant 0 : i32
    %c0_i32_1 = arith.constant 0 : i32
    return %arg0, %c0_i32, %c0_i32_0 : i32, i32, i32
  }
  func.func @transform_1(%arg0: i32) -> (i32, i32) {
    %c0_i32 = arith.constant 0 : i32
    %c0_i32_0 = arith.constant 0 : i32
    %c0_i32_1 = arith.constant 0 : i32
    return %c0_i32, %c0_i32_0 : i32, i32
  }
  func.func @transform_2(%arg0: i32) -> (i32, i32) {
    %c0_i32 = arith.constant 0 : i32
    %c0_i32_0 = arith.constant 0 : i32
    %c0_i32_1 = arith.constant 0 : i32
    return %c0_i32, %c0_i32_0 : i32, i32
  }
  func.func @transform_3(%arg0: i32) -> (i32, i32) {
    %c0_i32 = arith.constant 0 : i32
    %c0_i32_0 = arith.constant 0 : i32
    %c0_i32_1 = arith.constant 0 : i32
    return %c0_i32, %c0_i32_0 : i32, i32
  }
  func.func @transform_4(%arg0: i32) -> (i32, i32) {
    %c0_i32 = arith.constant 0 : i32
    %c0_i32_0 = arith.constant 0 : i32
    %c0_i32_1 = arith.constant 0 : i32
    return %c0_i32, %c0_i32_0 : i32, i32
  }
  func.func @transform_5(%arg0: i32) -> (i32, i32) {
    %c0_i32 = arith.constant 0 : i32
    %c0_i32_0 = arith.constant 0 : i32
    return %arg0, %c0_i32 : i32, i32
  }
}

</mosaic_0001>

<llo_original>
// kernel: tpu_custom_call.1
$region0: #{tpu_custom_call.1}
  #allocation0 [shape = 'u32[]', space=smem, size = 0x4, offset = 0x4, fixed_abs, tag = 'smem constant byte address 0x4 - core index']
  #allocation1 [shape = 'u32[144,128]{1,0:T(1,128)}', space=vmem, size = 0x12000, scoped, tag = 'internal scratch']
  %s0 = inlined_call_operand.vmem [shape: f32[2,256,64], index: 0, kind: input, shape index: {}]
  %s1 = inlined_call_operand.hbm [shape: f32[256,512], index: 1, kind: input, shape index: {}]
  %s2 = inlined_call_operand.vmem [shape: f32[512,128], index: 2, kind: input, shape index: {}]
  %s3 = inlined_call_operand.vmem [shape: f32[1,512], index: 3, kind: input, shape index: {}]
  %s4 = inlined_call_operand.vmem [shape: f32[1,128], index: 4, kind: input, shape index: {}]
  %s5 = inlined_call_operand.hbm [shape: f32[2,128], index: 5, kind: output, shape index: {}]
  %s6 = sld [smem:[#allocation0]]
  $region34: #{tpu_custom_call.1} parent=0
    _
  %s8 = ssub.s32 1, %s6
  %s9 = scalar_select 0, %s8, %s6
  $region1: #{tpu_custom_call.1} parent=0
    #allocation2 [shape = 'u8[524288]{0}', space=vmem, size = 0x80000, scoped, tag = 'input window, operand 1, single buffered']
    #allocation3 [shape = 's32[1]{0}', space=sflag, size = 0x4, scoped, tag = 'scoped memory for tpu_custom_call.1']
    #allocation4 [shape = 's32[1]{0}', space=sflag, size = 0x4, scoped, tag = 'scoped memory for tpu_custom_call.1']
    #allocation5 [shape = 'u8[1024]{0}', space=vmem, size = 0x400, scoped, tag = 'output window, operand 0, single buffered']
    %10 = vsyncpa [#allocation3], 0
    %11 = vsyncpa [#allocation4], 0
    // Predicated region
    $region2: #{tpu_custom_call.1} parent=1 // pred_check
      _
    $region3: #{tpu_custom_call.1} parent=1 // pred_check_branch
      %13 = sbr.rel (0) target = $region5
    $region4: #{tpu_custom_call.1} parent=1 // pred_region
      _
    $region5: #{tpu_custom_call.1} parent=1 // pred_fallthru
      _
    // Predicated region
    $region6: #{tpu_custom_call.1} parent=1 // pred_check
      _
    $region7: #{tpu_custom_call.1} parent=1 // pred_check_branch
      %15 = sbr.rel (0) target = $region9
    $region8: #{tpu_custom_call.1} parent=1 // pred_region
      %s17 = ssub.s32 16384, 16384
      %18 = vsyncadd [#allocation3], %s17
      %s19 = sshll.u32 [#allocation2], 4
      %s20 = int_to_ptr.vmem [resolvable:$true] %s19
      %25 = dma.hbm_to_vmem [thread:$0]  %s1, 16384, %s20, [#allocation3], 512, 512, 32
    $region9: #{tpu_custom_call.1} parent=1 // pred_fallthru
      _
    // Predicated region
    $region10: #{tpu_custom_call.1} parent=1 // pred_check
      _
    $region11: #{tpu_custom_call.1} parent=1 // pred_check_branch
      %27 = sbr.rel (0) target = $region13
    $region12: #{tpu_custom_call.1} parent=1 // pred_region
      _
    $region13: #{tpu_custom_call.1} parent=1 // pred_fallthru
      _
    // Predicated region
    $region14: #{tpu_custom_call.1} parent=1 // pred_check
      _
    $region15: #{tpu_custom_call.1} parent=1 // pred_check_branch
      %29 = sbr.rel (0) target = $region17
    $region16: #{tpu_custom_call.1} parent=1 // pred_region
      _
    $region17: #{tpu_custom_call.1} parent=1 // pred_fallthru
      _
    // Predicated region
    $region18: #{tpu_custom_call.1} parent=1 // pred_check
      _
    $region19: #{tpu_custom_call.1} parent=1 // pred_check_branch
      %31 = sbr.rel (0) target = $region21
    $region20: #{tpu_custom_call.1} parent=1 // pred_region
      _
    $region21: #{tpu_custom_call.1} parent=1 // pred_fallthru
      _
    // Predicated region
    $region22: #{tpu_custom_call.1} parent=1 // pred_check
      _
    $region23: #{tpu_custom_call.1} parent=1 // pred_check_branch
      %33 = sbr.rel (0) target = $region25
    $region24: #{tpu_custom_call.1} parent=1 // pred_region
      %34 = dma.done [#allocation3], 16384
    $region25: #{tpu_custom_call.1} parent=1 // pred_fallthru
      _
    %v35 = vld [vmem:[%s0] sm:$0xff]
    %v36 = vld [vmem:[%s0 + $0x8] sm:$0xff]
    %v37 = vld [vmem:[%s0 + $0x10] sm:$0xff]
    %v38 = vld [vmem:[%s0 + $0x18] sm:$0xff]
    %v39 = vld [vmem:[%s0 + $0x20] sm:$0xff]
    %v40 = vld [vmem:[%s0 + $0x28] sm:$0xff]
    %v41 = vld [vmem:[%s0 + $0x30] sm:$0xff]
    %v42 = vld [vmem:[%s0 + $0x38] sm:$0xff]
    %v43 = vld [vmem:[%s0 + $0x40] sm:$0xff]
    %v44 = vld [vmem:[%s0 + $0x48] sm:$0xff]
    %v45 = vld [vmem:[%s0 + $0x50] sm:$0xff]
    %v46 = vld [vmem:[%s0 + $0x58] sm:$0xff]
    %v47 = vld [vmem:[%s0 + $0x60] sm:$0xff]
    %v48 = vld [vmem:[%s0 + $0x68] sm:$0xff]
    %v49 = vld [vmem:[%s0 + $0x70] sm:$0xff]
    %v50 = vld [vmem:[%s0 + $0x78] sm:$0xff]
    %v51 = vld [vmem:[%s0 + $0x80] sm:$0xff]
    %v52 = vld [vmem:[%s0 + $0x88] sm:$0xff]
    %v53 = vld [vmem:[%s0 + $0x90] sm:$0xff]
    %v54 = vld [vmem:[%s0 + $0x98] sm:$0xff]
    %v55 = vld [vmem:[%s0 + $0xa0] sm:$0xff]
    %v56 = vld [vmem:[%s0 + $0xa8] sm:$0xff]
    %v57 = vld [vmem:[%s0 + $0xb0] sm:$0xff]
    %v58 = vld [vmem:[%s0 + $0xb8] sm:$0xff]
    %v59 = vld [vmem:[%s0 + $0xc0] sm:$0xff]
    %v60 = vld [vmem:[%s0 + $0xc8] sm:$0xff]
    %v61 = vld [vmem:[%s0 + $0xd0] sm:$0xff]
    %v62 = vld [vmem:[%s0 + $0xd8] sm:$0xff]
    %v63 = vld [vmem:[%s0 + $0xe0] sm:$0xff]
    %v64 = vld [vmem:[%s0 + $0xe8] sm:$0xff]
    %v65 = vld [vmem:[%s0 + $0xf0] sm:$0xff]
    %v66 = vld [vmem:[%s0 + $0xf8] sm:$0xff]
    %v67 = vld [vmem:[%s0 + $0x100] sm:$0xff]
    %v68 = vld [vmem:[%s0 + $0x108] sm:$0xff]
    %v69 = vld [vmem:[%s0 + $0x110] sm:$0xff]
    %v70 = vld [vmem:[%s0 + $0x118] sm:$0xff]
    %v71 = vld [vmem:[%s0 + $0x120] sm:$0xff]
    %v72 = vld [vmem:[%s0 + $0x128] sm:$0xff]
    %v73 = vld [vmem:[%s0 + $0x130] sm:$0xff]
    %v74 = vld [vmem:[%s0 + $0x138] sm:$0xff]
    %v75 = vld [vmem:[%s0 + $0x140] sm:$0xff]
    %v76 = vld [vmem:[%s0 + $0x148] sm:$0xff]
    %v77 = vld [vmem:[%s0 + $0x150] sm:$0xff]
    %v78 = vld [vmem:[%s0 + $0x158] sm:$0xff]
    %v79 = vld [vmem:[%s0 + $0x160] sm:$0xff]
    %v80 = vld [vmem:[%s0 + $0x168] sm:$0xff]
    %v81 = vld [vmem:[%s0 + $0x170] sm:$0xff]
    %v82 = vld [vmem:[%s0 + $0x178] sm:$0xff]
    %v83 = vld [vmem:[%s0 + $0x180] sm:$0xff]
    %v84 = vld [vmem:[%s0 + $0x188] sm:$0xff]
    %v85 = vld [vmem:[%s0 + $0x190] sm:$0xff]
    %v86 = vld [vmem:[%s0 + $0x198] sm:$0xff]
    %v87 = vld [vmem:[%s0 + $0x1a0] sm:$0xff]
    %v88 = vld [vmem:[%s0 + $0x1a8] sm:$0xff]
    %v89 = vld [vmem:[%s0 + $0x1b0] sm:$0xff]
    %v90 = vld [vmem:[%s0 + $0x1b8] sm:$0xff]
    %v91 = vld [vmem:[%s0 + $0x1c0] sm:$0xff]
    %v92 = vld [vmem:[%s0 + $0x1c8] sm:$0xff]
    %v93 = vld [vmem:[%s0 + $0x1d0] sm:$0xff]
    %v94 = vld [vmem:[%s0 + $0x1d8] sm:$0xff]
    %v95 = vld [vmem:[%s0 + $0x1e0] sm:$0xff]
    %v96 = vld [vmem:[%s0 + $0x1e8] sm:$0xff]
    %v97 = vld [vmem:[%s0 + $0x1f0] sm:$0xff]
    %v98 = vld [vmem:[%s0 + $0x1f8] sm:$0xff]
    %vm99 = vcmask 523264
    %v100 = vsel %vm99, %v35, 0.0
    %101 = vadd.xlane.f32.xlu0 %v100
    %v102 = vpop.xlane.xlu0 %101
    %v103 = vsel %vm99, %v36, 0.0
    %104 = vadd.xlane.f32.xlu0 %v103
    %v105 = vpop.xlane.xlu0 %104
    %v106 = vsel %vm99, %v37, 0.0
    %107 = vadd.xlane.f32.xlu0 %v106
    %v108 = vpop.xlane.xlu0 %107
    %v109 = vsel %vm99, %v38, 0.0
    %110 = vadd.xlane.f32.xlu0 %v109
    %v111 = vpop.xlane.xlu0 %110
    %v112 = vsel %vm99, %v39, 0.0
    %113 = vadd.xlane.f32.xlu0 %v112
    %v114 = vpop.xlane.xlu0 %113
    %v115 = vsel %vm99, %v40, 0.0
    %116 = vadd.xlane.f32.xlu0 %v115
    %v117 = vpop.xlane.xlu0 %116
    %v118 = vsel %vm99, %v41, 0.0
    %119 = vadd.xlane.f32.xlu0 %v118
    %v120 = vpop.xlane.xlu0 %119
    %v121 = vsel %vm99, %v42, 0.0
    %122 = vadd.xlane.f32.xlu0 %v121
    %v123 = vpop.xlane.xlu0 %122
    %v124 = vsel %vm99, %v43, 0.0
    %125 = vadd.xlane.f32.xlu0 %v124
    %v126 = vpop.xlane.xlu0 %125
    %v127 = vsel %vm99, %v44, 0.0
    %128 = vadd.xlane.f32.xlu0 %v127
    %v129 = vpop.xlane.xlu0 %128
    %v130 = vsel %vm99, %v45, 0.0
    %131 = vadd.xlane.f32.xlu0 %v130
    %v132 = vpop.xlane.xlu0 %131
    %v133 = vsel %vm99, %v46, 0.0
    %134 = vadd.xlane.f32.xlu0 %v133
    %v135 = vpop.xlane.xlu0 %134
    %v136 = vsel %vm99, %v47, 0.0
    %137 = vadd.xlane.f32.xlu0 %v136
    %v138 = vpop.xlane.xlu0 %137
    %v139 = vsel %vm99, %v48, 0.0
    %140 = vadd.xlane.f32.xlu0 %v139
    %v141 = vpop.xlane.xlu0 %140
    %v142 = vsel %vm99, %v49, 0.0
    %143 = vadd.xlane.f32.xlu0 %v142
    %v144 = vpop.xlane.xlu0 %143
    %v145 = vsel %vm99, %v50, 0.0
    %146 = vadd.xlane.f32.xlu0 %v145
    %v147 = vpop.xlane.xlu0 %146
    %v148 = vsel %vm99, %v51, 0.0
    %149 = vadd.xlane.f32.xlu0 %v148
    %v150 = vpop.xlane.xlu0 %149
    %v151 = vsel %vm99, %v52, 0.0
    %152 = vadd.xlane.f32.xlu0 %v151
    %v153 = vpop.xlane.xlu0 %152
    %v154 = vsel %vm99, %v53, 0.0
    %155 = vadd.xlane.f32.xlu0 %v154
    %v156 = vpop.xlane.xlu0 %155
    %v157 = vsel %vm99, %v54, 0.0
    %158 = vadd.xlane.f32.xlu0 %v157
    %v159 = vpop.xlane.xlu0 %158
    %v160 = vsel %vm99, %v55, 0.0
    %161 = vadd.xlane.f32.xlu0 %v160
    %v162 = vpop.xlane.xlu0 %161
    %v163 = vsel %vm99, %v56, 0.0
    %164 = vadd.xlane.f32.xlu0 %v163
    %v165 = vpop.xlane.xlu0 %164
    %v166 = vsel %vm99, %v57, 0.0
    %167 = vadd.xlane.f32.xlu0 %v166
    %v168 = vpop.xlane.xlu0 %167
    %v169 = vsel %vm99, %v58, 0.0
    %170 = vadd.xlane.f32.xlu0 %v169
    %v171 = vpop.xlane.xlu0 %170
    %v172 = vsel %vm99, %v59, 0.0
    %173 = vadd.xlane.f32.xlu0 %v172
    %v174 = vpop.xlane.xlu0 %173
    %v175 = vsel %vm99, %v60, 0.0
    %176 = vadd.xlane.f32.xlu0 %v175
    %v177 = vpop.xlane.xlu0 %176
    %v178 = vsel %vm99, %v61, 0.0
    %179 = vadd.xlane.f32.xlu0 %v178
    %v180 = vpop.xlane.xlu0 %179
    %v181 = vsel %vm99, %v62, 0.0
    %182 = vadd.xlane.f32.xlu0 %v181
    %v183 = vpop.xlane.xlu0 %182
    %v184 = vsel %vm99, %v63, 0.0
    %185 = vadd.xlane.f32.xlu0 %v184
    %v186 = vpop.xlane.xlu0 %185
    %v187 = vsel %vm99, %v64, 0.0
    %188 = vadd.xlane.f32.xlu0 %v187
    %v189 = vpop.xlane.xlu0 %188
    %v190 = vsel %vm99, %v65, 0.0
    %191 = vadd.xlane.f32.xlu0 %v190
    %v192 = vpop.xlane.xlu0 %191
    %v193 = vsel %vm99, %v66, 0.0
    %194 = vadd.xlane.f32.xlu0 %v193
    %v195 = vpop.xlane.xlu0 %194
    %v196 = vsel %vm99, %v67, 0.0
    %197 = vadd.xlane.f32.xlu0 %v196
    %v198 = vpop.xlane.xlu0 %197
    %v199 = vsel %vm99, %v68, 0.0
    %200 = vadd.xlane.f32.xlu0 %v199
    %v201 = vpop.xlane.xlu0 %200
    %v202 = vsel %vm99, %v69, 0.0
    %203 = vadd.xlane.f32.xlu0 %v202
    %v204 = vpop.xlane.xlu0 %203
    %v205 = vsel %vm99, %v70, 0.0
    %206 = vadd.xlane.f32.xlu0 %v205
    %v207 = vpop.xlane.xlu0 %206
    %v208 = vsel %vm99, %v71, 0.0
    %209 = vadd.xlane.f32.xlu0 %v208
    %v210 = vpop.xlane.xlu0 %209
    %v211 = vsel %vm99, %v72, 0.0
    %212 = vadd.xlane.f32.xlu0 %v211
    %v213 = vpop.xlane.xlu0 %212
    %v214 = vsel %vm99, %v73, 0.0
    %215 = vadd.xlane.f32.xlu0 %v214
    %v216 = vpop.xlane.xlu0 %215
    %v217 = vsel %vm99, %v74, 0.0
    %218 = vadd.xlane.f32.xlu0 %v217
    %v219 = vpop.xlane.xlu0 %218
    %v220 = vsel %vm99, %v75, 0.0
    %221 = vadd.xlane.f32.xlu0 %v220
    %v222 = vpop.xlane.xlu0 %221
    %v223 = vsel %vm99, %v76, 0.0
    %224 = vadd.xlane.f32.xlu0 %v223
    %v225 = vpop.xlane.xlu0 %224
    %v226 = vsel %vm99, %v77, 0.0
    %227 = vadd.xlane.f32.xlu0 %v226
    %v228 = vpop.xlane.xlu0 %227
    %v229 = vsel %vm99, %v78, 0.0
    %230 = vadd.xlane.f32.xlu0 %v229
    %v231 = vpop.xlane.xlu0 %230
    %v232 = vsel %vm99, %v79, 0.0
    %233 = vadd.xlane.f32.xlu0 %v232
    %v234 = vpop.xlane.xlu0 %233
    %v235 = vsel %vm99, %v80, 0.0
    %236 = vadd.xlane.f32.xlu0 %v235
    %v237 = vpop.xlane.xlu0 %236
    %v238 = vsel %vm99, %v81, 0.0
    %239 = vadd.xlane.f32.xlu0 %v238
    %v240 = vpop.xlane.xlu0 %239
    %v241 = vsel %vm99, %v82, 0.0
    %242 = vadd.xlane.f32.xlu0 %v241
    %v243 = vpop.xlane.xlu0 %242
    %v244 = vsel %vm99, %v83, 0.0
    %245 = vadd.xlane.f32.xlu0 %v244
    %v246 = vpop.xlane.xlu0 %245
    %v247 = vsel %vm99, %v84, 0.0
    %248 = vadd.xlane.f32.xlu0 %v247
    %v249 = vpop.xlane.xlu0 %248
    %v250 = vsel %vm99, %v85, 0.0
    %251 = vadd.xlane.f32.xlu0 %v250
    %v252 = vpop.xlane.xlu0 %251
    %v253 = vsel %vm99, %v86, 0.0
    %254 = vadd.xlane.f32.xlu0 %v253
    %v255 = vpop.xlane.xlu0 %254
    %v256 = vsel %vm99, %v87, 0.0
    %257 = vadd.xlane.f32.xlu0 %v256
    %v258 = vpop.xlane.xlu0 %257
    %v259 = vsel %vm99, %v88, 0.0
    %260 = vadd.xlane.f32.xlu0 %v259
    %v261 = vpop.xlane.xlu0 %260
    %v262 = vsel %vm99, %v89, 0.0
    %263 = vadd.xlane.f32.xlu0 %v262
    %v264 = vpop.xlane.xlu0 %263
    %v265 = vsel %vm99, %v90, 0.0
    %266 = vadd.xlane.f32.xlu0 %v265
    %v267 = vpop.xlane.xlu0 %266
    %v268 = vsel %vm99, %v91, 0.0
    %269 = vadd.xlane.f32.xlu0 %v268
    %v270 = vpop.xlane.xlu0 %269
    %v271 = vsel %vm99, %v92, 0.0
    %272 = vadd.xlane.f32.xlu0 %v271
    %v273 = vpop.xlane.xlu0 %272
    %v274 = vsel %vm99, %v93, 0.0
    %275 = vadd.xlane.f32.xlu0 %v274
    %v276 = vpop.xlane.xlu0 %275
    %v277 = vsel %vm99, %v94, 0.0
    %278 = vadd.xlane.f32.xlu0 %v277
    %v279 = vpop.xlane.xlu0 %278
    %v280 = vsel %vm99, %v95, 0.0
    %281 = vadd.xlane.f32.xlu0 %v280
    %v282 = vpop.xlane.xlu0 %281
    %v283 = vsel %vm99, %v96, 0.0
    %284 = vadd.xlane.f32.xlu0 %v283
    %v285 = vpop.xlane.xlu0 %284
    %v286 = vsel %vm99, %v97, 0.0
    %287 = vadd.xlane.f32.xlu0 %v286
    %v288 = vpop.xlane.xlu0 %287
    %v289 = vsel %vm99, %v98, 0.0
    %290 = vadd.xlane.f32.xlu0 %v289
    %v291 = vpop.xlane.xlu0 %290
    %v292 = vrcp.pop 64.0
    %v293 = vmul.f32 %v102, %v292
    %v294 = vmul.f32 %v105, %v292
    %v295 = vmul.f32 %v108, %v292
    %v296 = vmul.f32 %v111, %v292
    %v297 = vmul.f32 %v114, %v292
    %v298 = vmul.f32 %v117, %v292
    %v299 = vmul.f32 %v120, %v292
    %v300 = vmul.f32 %v123, %v292
    %v301 = vmul.f32 %v126, %v292
    %v302 = vmul.f32 %v129, %v292
    %v303 = vmul.f32 %v132, %v292
    %v304 = vmul.f32 %v135, %v292
    %v305 = vmul.f32 %v138, %v292
    %v306 = vmul.f32 %v141, %v292
    %v307 = vmul.f32 %v144, %v292
    %v308 = vmul.f32 %v147, %v292
    %v309 = vmul.f32 %v150, %v292
    %v310 = vmul.f32 %v153, %v292
    %v311 = vmul.f32 %v156, %v292
    %v312 = vmul.f32 %v159, %v292
    %v313 = vmul.f32 %v162, %v292
    %v314 = vmul.f32 %v165, %v292
    %v315 = vmul.f32 %v168, %v292
    %v316 = vmul.f32 %v171, %v292
    %v317 = vmul.f32 %v174, %v292
    %v318 = vmul.f32 %v177, %v292
    %v319 = vmul.f32 %v180, %v292
    %v320 = vmul.f32 %v183, %v292
    %v321 = vmul.f32 %v186, %v292
    %v322 = vmul.f32 %v189, %v292
    %v323 = vmul.f32 %v192, %v292
    %v324 = vmul.f32 %v195, %v292
    %v325 = vmul.f32 %v198, %v292
    %v326 = vmul.f32 %v201, %v292
    %v327 = vmul.f32 %v204, %v292
    %v328 = vmul.f32 %v207, %v292
    %v329 = vmul.f32 %v210, %v292
    %v330 = vmul.f32 %v213, %v292
    %v331 = vmul.f32 %v216, %v292
    %v332 = vmul.f32 %v219, %v292
    %v333 = vmul.f32 %v222, %v292
    %v334 = vmul.f32 %v225, %v292
    %v335 = vmul.f32 %v228, %v292
    %v336 = vmul.f32 %v231, %v292
    %v337 = vmul.f32 %v234, %v292
    %v338 = vmul.f32 %v237, %v292
    %v339 = vmul.f32 %v240, %v292
    %v340 = vmul.f32 %v243, %v292
    %v341 = vmul.f32 %v246, %v292
    %v342 = vmul.f32 %v249, %v292
    %v343 = vmul.f32 %v252, %v292
    %v344 = vmul.f32 %v255, %v292
    %v345 = vmul.f32 %v258, %v292
    %v346 = vmul.f32 %v261, %v292
    %v347 = vmul.f32 %v264, %v292
    %v348 = vmul.f32 %v267, %v292
    %v349 = vmul.f32 %v270, %v292
    %v350 = vmul.f32 %v273, %v292
    %v351 = vmul.f32 %v276, %v292
    %v352 = vmul.f32 %v279, %v292
    %v353 = vmul.f32 %v282, %v292
    %v354 = vmul.f32 %v285, %v292
    %v355 = vmul.f32 %v288, %v292
    %v356 = vmul.f32 %v291, %v292
    %v357 = vld [vmem:[#allocation2] sm:$0xff]
    %v358 = vld [vmem:[#allocation2 + $0x8] sm:$0xff]
    %v359 = vld [vmem:[#allocation2 + $0x10] sm:$0xff]
    %v360 = vld [vmem:[#allocation2 + $0x18] sm:$0xff]
    %v361 = vld [vmem:[#allocation2 + $0x20] sm:$0xff]
    %v362 = vld [vmem:[#allocation2 + $0x28] sm:$0xff]
    %v363 = vld [vmem:[#allocation2 + $0x30] sm:$0xff]
    %v364 = vld [vmem:[#allocation2 + $0x38] sm:$0xff]
    %v365 = vld [vmem:[#allocation2 + $0x40] sm:$0xff]
    %v366 = vld [vmem:[#allocation2 + $0x48] sm:$0xff]
    %v367 = vld [vmem:[#allocation2 + $0x50] sm:$0xff]
    %v368 = vld [vmem:[#allocation2 + $0x58] sm:$0xff]
    %v369 = vld [vmem:[#allocation2 + $0x60] sm:$0xff]
    %v370 = vld [vmem:[#allocation2 + $0x68] sm:$0xff]
    %v371 = vld [vmem:[#allocation2 + $0x70] sm:$0xff]
    %v372 = vld [vmem:[#allocation2 + $0x78] sm:$0xff]
    %v373 = vld [vmem:[#allocation2 + $0x80] sm:$0xff]
    %v374 = vld [vmem:[#allocation2 + $0x88] sm:$0xff]
    %v375 = vld [vmem:[#allocation2 + $0x90] sm:$0xff]
    %v376 = vld [vmem:[#allocation2 + $0x98] sm:$0xff]
    %v377 = vld [vmem:[#allocation2 + $0xa0] sm:$0xff]
    %v378 = vld [vmem:[#allocation2 + $0xa8] sm:$0xff]
    %v379 = vld [vmem:[#allocation2 + $0xb0] sm:$0xff]
    %v380 = vld [vmem:[#allocation2 + $0xb8] sm:$0xff]
    %v381 = vld [vmem:[#allocation2 + $0xc0] sm:$0xff]
    %v382 = vld [vmem:[#allocation2 + $0xc8] sm:$0xff]
    %v383 = vld [vmem:[#allocation2 + $0xd0] sm:$0xff]
    %v384 = vld [vmem:[#allocation2 + $0xd8] sm:$0xff]
    %v385 = vld [vmem:[#allocation2 + $0xe0] sm:$0xff]
    %v386 = vld [vmem:[#allocation2 + $0xe8] sm:$0xff]
    %v387 = vld [vmem:[#allocation2 + $0xf0] sm:$0xff]
    %v388 = vld [vmem:[#allocation2 + $0xf8] sm:$0xff]
    %v389 = vld [vmem:[#allocation2 + $0x100] sm:$0xff]
    %v390 = vld [vmem:[#allocation2 + $0x108] sm:$0xff]
    %v391 = vld [vmem:[#allocation2 + $0x110] sm:$0xff]
    %v392 = vld [vmem:[#allocation2 + $0x118] sm:$0xff]
    %v393 = vld [vmem:[#allocation2 + $0x120] sm:$0xff]
    %v394 = vld [vmem:[#allocation2 + $0x128] sm:$0xff]
    %v395 = vld [vmem:[#allocation2 + $0x130] sm:$0xff]
    %v396 = vld [vmem:[#allocation2 + $0x138] sm:$0xff]
    %v397 = vld [vmem:[#allocation2 + $0x140] sm:$0xff]
    %v398 = vld [vmem:[#allocation2 + $0x148] sm:$0xff]
    %v399 = vld [vmem:[#allocation2 + $0x150] sm:$0xff]
    %v400 = vld [vmem:[#allocation2 + $0x158] sm:$0xff]
    %v401 = vld [vmem:[#allocation2 + $0x160] sm:$0xff]
    %v402 = vld [vmem:[#allocation2 + $0x168] sm:$0xff]
    %v403 = vld [vmem:[#allocation2 + $0x170] sm:$0xff]
    %v404 = vld [vmem:[#allocation2 + $0x178] sm:$0xff]
    %v405 = vld [vmem:[#allocation2 + $0x180] sm:$0xff]
    %v406 = vld [vmem:[#allocation2 + $0x188] sm:$0xff]
    %v407 = vld [vmem:[#allocation2 + $0x190] sm:$0xff]
    %v408 = vld [vmem:[#allocation2 + $0x198] sm:$0xff]
    %v409 = vld [vmem:[#allocation2 + $0x1a0] sm:$0xff]
    %v410 = vld [vmem:[#allocation2 + $0x1a8] sm:$0xff]
    %v411 = vld [vmem:[#allocation2 + $0x1b0] sm:$0xff]
    %v412 = vld [vmem:[#allocation2 + $0x1b8] sm:$0xff]
    %v413 = vld [vmem:[#allocation2 + $0x1c0] sm:$0xff]
    %v414 = vld [vmem:[#allocation2 + $0x1c8] sm:$0xff]
    %v415 = vld [vmem:[#allocation2 + $0x1d0] sm:$0xff]
    %v416 = vld [vmem:[#allocation2 + $0x1d8] sm:$0xff]
    %v417 = vld [vmem:[#allocation2 + $0x1e0] sm:$0xff]
    %v418 = vld [vmem:[#allocation2 + $0x1e8] sm:$0xff]
    %v419 = vld [vmem:[#allocation2 + $0x1f0] sm:$0xff]
    %v420 = vld [vmem:[#allocation2 + $0x1f8] sm:$0xff]
    %v421 = vld [vmem:[#allocation2 + $0x200] sm:$0xff]
    %v422 = vld [vmem:[#allocation2 + $0x208] sm:$0xff]
    %v423 = vld [vmem:[#allocation2 + $0x210] sm:$0xff]
    %v424 = vld [vmem:[#allocation2 + $0x218] sm:$0xff]
    %v425 = vld [vmem:[#allocation2 + $0x220] sm:$0xff]
    %v426 = vld [vmem:[#allocation2 + $0x228] sm:$0xff]
    %v427 = vld [vmem:[#allocation2 + $0x230] sm:$0xff]
    %v428 = vld [vmem:[#allocation2 + $0x238] sm:$0xff]
    %v429 = vld [vmem:[#allocation2 + $0x240] sm:$0xff]
    %v430 = vld [vmem:[#allocation2 + $0x248] sm:$0xff]
    %v431 = vld [vmem:[#allocation2 + $0x250] sm:$0xff]
    %v432 = vld [vmem:[#allocation2 + $0x258] sm:$0xff]
    %v433 = vld [vmem:[#allocation2 + $0x260] sm:$0xff]
    %v434 = vld [vmem:[#allocation2 + $0x268] sm:$0xff]
    %v435 = vld [vmem:[#allocation2 + $0x270] sm:$0xff]
    %v436 = vld [vmem:[#allocation2 + $0x278] sm:$0xff]
    %v437 = vld [vmem:[#allocation2 + $0x280] sm:$0xff]
    %v438 = vld [vmem:[#allocation2 + $0x288] sm:$0xff]
    %v439 = vld [vmem:[#allocation2 + $0x290] sm:$0xff]
    %v440 = vld [vmem:[#allocation2 + $0x298] sm:$0xff]
    %v441 = vld [vmem:[#allocation2 + $0x2a0] sm:$0xff]
    %v442 = vld [vmem:[#allocation2 + $0x2a8] sm:$0xff]
    %v443 = vld [vmem:[#allocation2 + $0x2b0] sm:$0xff]
    %v444 = vld [vmem:[#allocation2 + $0x2b8] sm:$0xff]
    %v445 = vld [vmem:[#allocation2 + $0x2c0] sm:$0xff]
    %v446 = vld [vmem:[#allocation2 + $0x2c8] sm:$0xff]
    %v447 = vld [vmem:[#allocation2 + $0x2d0] sm:$0xff]
    %v448 = vld [vmem:[#allocation2 + $0x2d8] sm:$0xff]
    %v449 = vld [vmem:[#allocation2 + $0x2e0] sm:$0xff]
    %v450 = vld [vmem:[#allocation2 + $0x2e8] sm:$0xff]
    %v451 = vld [vmem:[#allocation2 + $0x2f0] sm:$0xff]
    %v452 = vld [vmem:[#allocation2 + $0x2f8] sm:$0xff]
    %v453 = vld [vmem:[#allocation2 + $0x300] sm:$0xff]
    %v454 = vld [vmem:[#allocation2 + $0x308] sm:$0xff]
    %v455 = vld [vmem:[#allocation2 + $0x310] sm:$0xff]
    %v456 = vld [vmem:[#allocation2 + $0x318] sm:$0xff]
    %v457 = vld [vmem:[#allocation2 + $0x320] sm:$0xff]
    %v458 = vld [vmem:[#allocation2 + $0x328] sm:$0xff]
    %v459 = vld [vmem:[#allocation2 + $0x330] sm:$0xff]
    %v460 = vld [vmem:[#allocation2 + $0x338] sm:$0xff]
    %v461 = vld [vmem:[#allocation2 + $0x340] sm:$0xff]
    %v462 = vld [vmem:[#allocation2 + $0x348] sm:$0xff]
    %v463 = vld [vmem:[#allocation2 + $0x350] sm:$0xff]
    %v464 = vld [vmem:[#allocation2 + $0x358] sm:$0xff]
    %v465 = vld [vmem:[#allocation2 + $0x360] sm:$0xff]
    %v466 = vld [vmem:[#allocation2 + $0x368] sm:$0xff]
    %v467 = vld [vmem:[#allocation2 + $0x370] sm:$0xff]
    %v468 = vld [vmem:[#allocation2 + $0x378] sm:$0xff]
    %v469 = vld [vmem:[#allocation2 + $0x380] sm:$0xff]
    %v470 = vld [vmem:[#allocation2 + $0x388] sm:$0xff]
    %v471 = vld [vmem:[#allocation2 + $0x390] sm:$0xff]
    %v472 = vld [vmem:[#allocation2 + $0x398] sm:$0xff]
    %v473 = vld [vmem:[#allocation2 + $0x3a0] sm:$0xff]
    %v474 = vld [vmem:[#allocation2 + $0x3a8] sm:$0xff]
    %v475 = vld [vmem:[#allocation2 + $0x3b0] sm:$0xff]
    %v476 = vld [vmem:[#allocation2 + $0x3b8] sm:$0xff]
    %v477 = vld [vmem:[#allocation2 + $0x3c0] sm:$0xff]
    %v478 = vld [vmem:[#allocation2 + $0x3c8] sm:$0xff]
    %v479 = vld [vmem:[#allocation2 + $0x3d0] sm:$0xff]
    %v480 = vld [vmem:[#allocation2 + $0x3d8] sm:$0xff]
    %v481 = vld [vmem:[#allocation2 + $0x3e0] sm:$0xff]
    %v482 = vld [vmem:[#allocation2 + $0x3e8] sm:$0xff]
    %v483 = vld [vmem:[#allocation2 + $0x3f0] sm:$0xff]
    %v484 = vld [vmem:[#allocation2 + $0x3f8] sm:$0xff]
    %v485 = vld [vmem:[%s3] sm:$0xf]
    %v487 = vlaneseq
    %v488 = vshrl.u32 %v487, 7
    %v489 = vsub.s32 0, %v488
    %v490 = vrot.slane %v485, %v489
    %v491 = vlaneseq
    %v492 = vshrl.u32 %v491, 7
    %v493 = vsub.s32 1, %v492
    %v494 = vrot.slane %v485, %v493
    %v495 = vlaneseq
    %v496 = vshrl.u32 %v495, 7
    %v497 = vsub.s32 2, %v496
    %v498 = vrot.slane %v485, %v497
    %v499 = vlaneseq
    %v500 = vshrl.u32 %v499, 7
    %v501 = vsub.s32 3, %v500
    %v502 = vrot.slane %v485, %v501
    %v571 = vlaneseq
    %v572 = vand.u32 %v571, 127
    %v573 = vlaneseq
    %v574 = vshrl.u32 %v573, 7
    %v575 = vsub.s32 %v572, %v574
    %v576 = vrot.slane %v293, %v575
    %v577 = vadd.s32 %v572, 4294967288
    %v578 = vlaneseq
    %v579 = vshrl.u32 %v578, 7
    %v580 = vsub.s32 %v577, %v579
    %v581 = vrot.slane %v294, %v580
    %vm582 = vcmask 130112
    %v583 = vsel %vm582, %v581, %v576
    %v584 = vadd.s32 %v572, 4294967280
    %v585 = vlaneseq
    %v586 = vshrl.u32 %v585, 7
    %v587 = vsub.s32 %v584, %v586
    %v588 = vrot.slane %v295, %v587
    %vm589 = vcmask 195712
    %v590 = vsel %vm589, %v588, %v583
    %v591 = vadd.s32 %v572, 4294967272
    %v592 = vlaneseq
    %v593 = vshrl.u32 %v592, 7
    %v594 = vsub.s32 %v591, %v593
    %v595 = vrot.slane %v296, %v594
    %vm596 = vcmask 261312
    %v597 = vsel %vm596, %v595, %v590
    %v598 = vadd.s32 %v572, 4294967264
    %v599 = vlaneseq
    %v600 = vshrl.u32 %v599, 7
    %v601 = vsub.s32 %v598, %v600
    %v602 = vrot.slane %v297, %v601
    %vm603 = vcmask 326912
    %v604 = vsel %vm603, %v602, %v597
    %v605 = vadd.s32 %v572, 4294967256
    %v606 = vlaneseq
    %v607 = vshrl.u32 %v606, 7
    %v608 = vsub.s32 %v605, %v607
    %v609 = vrot.slane %v298, %v608
    %vm610 = vcmask 392512
    %v611 = vsel %vm610, %v609, %v604
    %v612 = vadd.s32 %v572, 4294967248
    %v613 = vlaneseq
    %v614 = vshrl.u32 %v613, 7
    %v615 = vsub.s32 %v612, %v614
    %v616 = vrot.slane %v299, %v615
    %vm617 = vcmask 458112
    %v618 = vsel %vm617, %v616, %v611
    %v619 = vadd.s32 %v572, 4294967240
    %v620 = vlaneseq
    %v621 = vshrl.u32 %v620, 7
    %v622 = vsub.s32 %v619, %v621
    %v623 = vrot.slane %v300, %v622
    %vm624 = vcmask 523712
    %v625 = vsel %vm624, %v623, %v618
    %v626 = vadd.s32 %v572, 4294967232
    %v627 = vlaneseq
    %v628 = vshrl.u32 %v627, 7
    %v629 = vsub.s32 %v626, %v628
    %v630 = vrot.slane %v301, %v629
    %vm631 = vcmask 589312
    %v632 = vsel %vm631, %v630, %v625
    %v633 = vadd.s32 %v572, 4294967224
    %v634 = vlaneseq
    %v635 = vshrl.u32 %v634, 7
    %v636 = vsub.s32 %v633, %v635
    %v637 = vrot.slane %v302, %v636
    %vm638 = vcmask 654912
    %v639 = vsel %vm638, %v637, %v632
    %v640 = vadd.s32 %v572, 4294967216
    %v641 = vlaneseq
    %v642 = vshrl.u32 %v641, 7
    %v643 = vsub.s32 %v640, %v642
    %v644 = vrot.slane %v303, %v643
    %vm645 = vcmask 720512
    %v646 = vsel %vm645, %v644, %v639
    %v647 = vadd.s32 %v572, 4294967208
    %v648 = vlaneseq
    %v649 = vshrl.u32 %v648, 7
    %v650 = vsub.s32 %v647, %v649
    %v651 = vrot.slane %v304, %v650
    %vm652 = vcmask 786112
    %v653 = vsel %vm652, %v651, %v646
    %v654 = vadd.s32 %v572, 4294967200
    %v655 = vlaneseq
    %v656 = vshrl.u32 %v655, 7
    %v657 = vsub.s32 %v654, %v656
    %v658 = vrot.slane %v305, %v657
    %vm659 = vcmask 851712
    %v660 = vsel %vm659, %v658, %v653
    %v661 = vadd.s32 %v572, 4294967192
    %v662 = vlaneseq
    %v663 = vshrl.u32 %v662, 7
    %v664 = vsub.s32 %v661, %v663
    %v665 = vrot.slane %v306, %v664
    %vm666 = vcmask 917312
    %v667 = vsel %vm666, %v665, %v660
    %v668 = vadd.s32 %v572, 4294967184
    %v669 = vlaneseq
    %v670 = vshrl.u32 %v669, 7
    %v671 = vsub.s32 %v668, %v670
    %v672 = vrot.slane %v307, %v671
    %vm673 = vcmask 982912
    %v674 = vsel %vm673, %v672, %v667
    %v675 = vadd.s32 %v572, 4294967176
    %v676 = vlaneseq
    %v677 = vshrl.u32 %v676, 7
    %v678 = vsub.s32 %v675, %v677
    %v679 = vrot.slane %v308, %v678
    %vm680 = vcmask 1048512
    %v681 = vsel %vm680, %v679, %v674
    %v682 = vlaneseq
    %v683 = vshrl.u32 %v682, 7
    %v684 = vsub.s32 %v572, %v683
    %v685 = vrot.slane %v309, %v684
    %v686 = vlaneseq
    %v687 = vshrl.u32 %v686, 7
    %v688 = vsub.s32 %v577, %v687
    %v689 = vrot.slane %v310, %v688
    %v690 = vsel %vm582, %v689, %v685
    %v691 = vlaneseq
    %v692 = vshrl.u32 %v691, 7
    %v693 = vsub.s32 %v584, %v692
    %v694 = vrot.slane %v311, %v693
    %v695 = vsel %vm589, %v694, %v690
    %v696 = vlaneseq
    %v697 = vshrl.u32 %v696, 7
    %v698 = vsub.s32 %v591, %v697
    %v699 = vrot.slane %v312, %v698
    %v700 = vsel %vm596, %v699, %v695
    %v701 = vlaneseq
    %v702 = vshrl.u32 %v701, 7
    %v703 = vsub.s32 %v598, %v702
    %v704 = vrot.slane %v313, %v703
    %v705 = vsel %vm603, %v704, %v700
    %v706 = vlaneseq
    %v707 = vshrl.u32 %v706, 7
    %v708 = vsub.s32 %v605, %v707
    %v709 = vrot.slane %v314, %v708
    %v710 = vsel %vm610, %v709, %v705
    %v711 = vlaneseq
    %v712 = vshrl.u32 %v711, 7
    %v713 = vsub.s32 %v612, %v712
    %v714 = vrot.slane %v315, %v713
    %v715 = vsel %vm617, %v714, %v710
    %v716 = vlaneseq
    %v717 = vshrl.u32 %v716, 7
    %v718 = vsub.s32 %v619, %v717
    %v719 = vrot.slane %v316, %v718
    %v720 = vsel %vm624, %v719, %v715
    %v721 = vlaneseq
    %v722 = vshrl.u32 %v721, 7
    %v723 = vsub.s32 %v626, %v722
    %v724 = vrot.slane %v317, %v723
    %v725 = vsel %vm631, %v724, %v720
    %v726 = vlaneseq
    %v727 = vshrl.u32 %v726, 7
    %v728 = vsub.s32 %v633, %v727
    %v729 = vrot.slane %v318, %v728
    %v730 = vsel %vm638, %v729, %v725
    %v731 = vlaneseq
    %v732 = vshrl.u32 %v731, 7
    %v733 = vsub.s32 %v640, %v732
    %v734 = vrot.slane %v319, %v733
    %v735 = vsel %vm645, %v734, %v730
    %v736 = vlaneseq
    %v737 = vshrl.u32 %v736, 7
    %v738 = vsub.s32 %v647, %v737
    %v739 = vrot.slane %v320, %v738
    %v740 = vsel %vm652, %v739, %v735
    %v741 = vlaneseq
    %v742 = vshrl.u32 %v741, 7
    %v743 = vsub.s32 %v654, %v742
    %v744 = vrot.slane %v321, %v743
    %v745 = vsel %vm659, %v744, %v740
    %v746 = vlaneseq
    %v747 = vshrl.u32 %v746, 7
    %v748 = vsub.s32 %v661, %v747
    %v749 = vrot.slane %v322, %v748
    %v750 = vsel %vm666, %v749, %v745
    %v751 = vlaneseq
    %v752 = vshrl.u32 %v751, 7
    %v753 = vsub.s32 %v668, %v752
    %v754 = vrot.slane %v323, %v753
    %v755 = vsel %vm673, %v754, %v750
    %v756 = vlaneseq
    %v757 = vshrl.u32 %v756, 7
    %v758 = vsub.s32 %v675, %v757
    %v759 = vrot.slane %v324, %v758
    %v760 = vsel %vm680, %v759, %v755
    %v761 = vlaneseq
    %v762 = vshrl.u32 %v761, 7
    %v763 = vsub.s32 %v572, %v762
    %v764 = vrot.slane %v325, %v763
    %v765 = vlaneseq
    %v766 = vshrl.u32 %v765, 7
    %v767 = vsub.s32 %v577, %v766
    %v768 = vrot.slane %v326, %v767
    %v769 = vsel %vm582, %v768, %v764
    %v770 = vlaneseq
    %v771 = vshrl.u32 %v770, 7
    %v772 = vsub.s32 %v584, %v771
    %v773 = vrot.slane %v327, %v772
    %v774 = vsel %vm589, %v773, %v769
    %v775 = vlaneseq
    %v776 = vshrl.u32 %v775, 7
    %v777 = vsub.s32 %v591, %v776
    %v778 = vrot.slane %v328, %v777
    %v779 = vsel %vm596, %v778, %v774
    %v780 = vlaneseq
    %v781 = vshrl.u32 %v780, 7
    %v782 = vsub.s32 %v598, %v781
    %v783 = vrot.slane %v329, %v782
    %v784 = vsel %vm603, %v783, %v779
    %v785 = vlaneseq
    %v786 = vshrl.u32 %v785, 7
    %v787 = vsub.s32 %v605, %v786
    %v788 = vrot.slane %v330, %v787
    %v789 = vsel %vm610, %v788, %v784
    %v790 = vlaneseq
    %v791 = vshrl.u32 %v790, 7
    %v792 = vsub.s32 %v612, %v791
    %v793 = vrot.slane %v331, %v792
    %v794 = vsel %vm617, %v793, %v789
    %v795 = vlaneseq
    %v796 = vshrl.u32 %v795, 7
    %v797 = vsub.s32 %v619, %v796
    %v798 = vrot.slane %v332, %v797
    %v799 = vsel %vm624, %v798, %v794
    %v800 = vlaneseq
    %v801 = vshrl.u32 %v800, 7
    %v802 = vsub.s32 %v626, %v801
    %v803 = vrot.slane %v333, %v802
    %v804 = vsel %vm631, %v803, %v799
    %v805 = vlaneseq
    %v806 = vshrl.u32 %v805, 7
    %v807 = vsub.s32 %v633, %v806
    %v808 = vrot.slane %v334, %v807
    %v809 = vsel %vm638, %v808, %v804
    %v810 = vlaneseq
    %v811 = vshrl.u32 %v810, 7
    %v812 = vsub.s32 %v640, %v811
    %v813 = vrot.slane %v335, %v812
    %v814 = vsel %vm645, %v813, %v809
    %v815 = vlaneseq
    %v816 = vshrl.u32 %v815, 7
    %v817 = vsub.s32 %v647, %v816
    %v818 = vrot.slane %v336, %v817
    %v819 = vsel %vm652, %v818, %v814
    %v820 = vlaneseq
    %v821 = vshrl.u32 %v820, 7
    %v822 = vsub.s32 %v654, %v821
    %v823 = vrot.slane %v337, %v822
    %v824 = vsel %vm659, %v823, %v819
    %v825 = vlaneseq
    %v826 = vshrl.u32 %v825, 7
    %v827 = vsub.s32 %v661, %v826
    %v828 = vrot.slane %v338, %v827
    %v829 = vsel %vm666, %v828, %v824
    %v830 = vlaneseq
    %v831 = vshrl.u32 %v830, 7
    %v832 = vsub.s32 %v668, %v831
    %v833 = vrot.slane %v339, %v832
    %v834 = vsel %vm673, %v833, %v829
    %v835 = vlaneseq
    %v836 = vshrl.u32 %v835, 7
    %v837 = vsub.s32 %v675, %v836
    %v838 = vrot.slane %v340, %v837
    %v839 = vsel %vm680, %v838, %v834
    %v840 = vlaneseq
    %v841 = vshrl.u32 %v840, 7
    %v842 = vsub.s32 %v572, %v841
    %v843 = vrot.slane %v341, %v842
    %v844 = vlaneseq
    %v845 = vshrl.u32 %v844, 7
    %v846 = vsub.s32 %v577, %v845
    %v847 = vrot.slane %v342, %v846
    %v848 = vsel %vm582, %v847, %v843
    %v849 = vlaneseq
    %v850 = vshrl.u32 %v849, 7
    %v851 = vsub.s32 %v584, %v850
    %v852 = vrot.slane %v343, %v851
    %v853 = vsel %vm589, %v852, %v848
    %v854 = vlaneseq
    %v855 = vshrl.u32 %v854, 7
    %v856 = vsub.s32 %v591, %v855
    %v857 = vrot.slane %v344, %v856
    %v858 = vsel %vm596, %v857, %v853
    %v859 = vlaneseq
    %v860 = vshrl.u32 %v859, 7
    %v861 = vsub.s32 %v598, %v860
    %v862 = vrot.slane %v345, %v861
    %v863 = vsel %vm603, %v862, %v858
    %v864 = vlaneseq
    %v865 = vshrl.u32 %v864, 7
    %v866 = vsub.s32 %v605, %v865
    %v867 = vrot.slane %v346, %v866
    %v868 = vsel %vm610, %v867, %v863
    %v869 = vlaneseq
    %v870 = vshrl.u32 %v869, 7
    %v871 = vsub.s32 %v612, %v870
    %v872 = vrot.slane %v347, %v871
    %v873 = vsel %vm617, %v872, %v868
    %v874 = vlaneseq
    %v875 = vshrl.u32 %v874, 7
    %v876 = vsub.s32 %v619, %v875
    %v877 = vrot.slane %v348, %v876
    %v878 = vsel %vm624, %v877, %v873
    %v879 = vlaneseq
    %v880 = vshrl.u32 %v879, 7
    %v881 = vsub.s32 %v626, %v880
    %v882 = vrot.slane %v349, %v881
    %v883 = vsel %vm631, %v882, %v878
    %v884 = vlaneseq
    %v885 = vshrl.u32 %v884, 7
    %v886 = vsub.s32 %v633, %v885
    %v887 = vrot.slane %v350, %v886
    %v888 = vsel %vm638, %v887, %v883
    %v889 = vlaneseq
    %v890 = vshrl.u32 %v889, 7
    %v891 = vsub.s32 %v640, %v890
    %v892 = vrot.slane %v351, %v891
    %v893 = vsel %vm645, %v892, %v888
    %v894 = vlaneseq
    %v895 = vshrl.u32 %v894, 7
    %v896 = vsub.s32 %v647, %v895
    %v897 = vrot.slane %v352, %v896
    %v898 = vsel %vm652, %v897, %v893
    %v899 = vlaneseq
    %v900 = vshrl.u32 %v899, 7
    %v901 = vsub.s32 %v654, %v900
    %v902 = vrot.slane %v353, %v901
    %v903 = vsel %vm659, %v902, %v898
    %v904 = vlaneseq
    %v905 = vshrl.u32 %v904, 7
    %v906 = vsub.s32 %v661, %v905
    %v907 = vrot.slane %v354, %v906
    %v908 = vsel %vm666, %v907, %v903
    %v909 = vlaneseq
    %v910 = vshrl.u32 %v909, 7
    %v911 = vsub.s32 %v668, %v910
    %v912 = vrot.slane %v355, %v911
    %v913 = vsel %vm673, %v912, %v908
    %v914 = vlaneseq
    %v915 = vshrl.u32 %v914, 7
    %v916 = vsub.s32 %v675, %v915
    %v917 = vrot.slane %v356, %v916
    %v918 = vsel %vm680, %v917, %v913
    %vm919 = vcmask 1041409
    %v920 = vsel %vm919, %v839, %v681
    %v921 = vsel %vm919, %v918, %v760
    %924 = vmatprep.subr.mxu0 %v358
    %925 = vmatpush1.msra.mxu0 %v357
    %926 = vmatprep.subr.mxu0 %v362
    %927 = vmatpush1.msra.mxu0 %v361
    %928 = vmatprep.subr.mxu0 %v366
    %929 = vmatpush1.msra.mxu0 %v365
    %930 = vmatprep.subr.mxu0 %v370
    %931 = vmatpush1.msra.mxu0 %v369
    %932 = vmatprep.subr.mxu0 %v374
    %933 = vmatpush1.msra.mxu0 %v373
    %934 = vmatprep.subr.mxu0 %v378
    %935 = vmatpush1.msra.mxu0 %v377
    %936 = vmatprep.subr.mxu0 %v382
    %937 = vmatpush1.msra.mxu0 %v381
    %938 = vmatprep.subr.mxu0 %v386
    %939 = vmatpush1.msra.mxu0 %v385
    %940 = vmatprep.subr.mxu0 %v390
    %941 = vmatpush1.msra.mxu0 %v389
    %942 = vmatprep.subr.mxu0 %v394
    %943 = vmatpush1.msra.mxu0 %v393
    %944 = vmatprep.subr.mxu0 %v398
    %945 = vmatpush1.msra.mxu0 %v397
    %946 = vmatprep.subr.mxu0 %v402
    %947 = vmatpush1.msra.mxu0 %v401
    %948 = vmatprep.subr.mxu0 %v406
    %949 = vmatpush1.msra.mxu0 %v405
    %950 = vmatprep.subr.mxu0 %v410
    %951 = vmatpush1.msra.mxu0 %v409
    %952 = vmatprep.subr.mxu0 %v414
    %953 = vmatpush1.msra.mxu0 %v413
    %954 = vmatprep.subr.mxu0 %v418
    %955 = vmatpush1.msra.mxu0 %v417
    %956 = vmatprep.subr.mxu0 %v422
    %957 = vmatpush1.msra.mxu0 %v421
    %958 = vmatprep.subr.mxu0 %v426
    %959 = vmatpush1.msra.mxu0 %v425
    %960 = vmatprep.subr.mxu0 %v430
    %961 = vmatpush1.msra.mxu0 %v429
    %962 = vmatprep.subr.mxu0 %v434
    %963 = vmatpush1.msra.mxu0 %v433
    %964 = vmatprep.subr.mxu0 %v438
    %965 = vmatpush1.msra.mxu0 %v437
    %966 = vmatprep.subr.mxu0 %v442
    %967 = vmatpush1.msra.mxu0 %v441
    %968 = vmatprep.subr.mxu0 %v446
    %969 = vmatpush1.msra.mxu0 %v445
    %970 = vmatprep.subr.mxu0 %v450
    %971 = vmatpush1.msra.mxu0 %v449
    %972 = vmatprep.subr.mxu0 %v454
    %973 = vmatpush1.msra.mxu0 %v453
    %974 = vmatprep.subr.mxu0 %v458
    %975 = vmatpush1.msra.mxu0 %v457
    %976 = vmatprep.subr.mxu0 %v462
    %977 = vmatpush1.msra.mxu0 %v461
    %978 = vmatprep.subr.mxu0 %v466
    %979 = vmatpush1.msra.mxu0 %v465
    %980 = vmatprep.subr.mxu0 %v470
    %981 = vmatpush1.msra.mxu0 %v469
    %982 = vmatprep.subr.mxu0 %v474
    %983 = vmatpush1.msra.mxu0 %v473
    %984 = vmatprep.subr.mxu0 %v478
    %985 = vmatpush1.msra.mxu0 %v477
    %986 = vmatprep.subr.mxu0 %v482
    %987 = vmatpush1.msra.mxu0 %v481
    %988 = vmatprep.mubr.f32.mxu0 %v921
    %989 = vmatmul.mubr.f32.gmra.mrb[0].mxu0 %v920
    %v990 = vpop.f32.mrb[0].mxu0
    %v991 = vadd.f32 %v490, %v990
    %v992 = vpop.f32.mrb[0].mxu0
    %v993 = vadd.f32 %v494, %v992
    %994 = vdwg.mxu0
    %995 = vmatprep.subr.mxu0 %v360
    %996 = vmatpush1.msra.mxu0 %v359
    %997 = vmatprep.subr.mxu0 %v364
    %998 = vmatpush1.msra.mxu0 %v363
    %999 = vmatprep.subr.mxu0 %v368
    %1000 = vmatpush1.msra.mxu0 %v367
    %1001 = vmatprep.subr.mxu0 %v372
    %1002 = vmatpush1.msra.mxu0 %v371
    %1003 = vmatprep.subr.mxu0 %v376
    %1004 = vmatpush1.msra.mxu0 %v375
    %1005 = vmatprep.subr.mxu0 %v380
    %1006 = vmatpush1.msra.mxu0 %v379
    %1007 = vmatprep.subr.mxu0 %v384
    %1008 = vmatpush1.msra.mxu0 %v383
    %1009 = vmatprep.subr.mxu0 %v388
    %1010 = vmatpush1.msra.mxu0 %v387
    %1011 = vmatprep.subr.mxu0 %v392
    %1012 = vmatpush1.msra.mxu0 %v391
    %1013 = vmatprep.subr.mxu0 %v396
    %1014 = vmatpush1.msra.mxu0 %v395
    %1015 = vmatprep.subr.mxu0 %v400
    %1016 = vmatpush1.msra.mxu0 %v399
    %1017 = vmatprep.subr.mxu0 %v404
    %1018 = vmatpush1.msra.mxu0 %v403
    %1019 = vmatprep.subr.mxu0 %v408
    %1020 = vmatpush1.msra.mxu0 %v407
    %1021 = vmatprep.subr.mxu0 %v412
    %1022 = vmatpush1.msra.mxu0 %v411
    %1023 = vmatprep.subr.mxu0 %v416
    %1024 = vmatpush1.msra.mxu0 %v415
    %1025 = vmatprep.subr.mxu0 %v420
    %1026 = vmatpush1.msra.mxu0 %v419
    %1027 = vmatprep.subr.mxu0 %v424
    %1028 = vmatpush1.msra.mxu0 %v423
    %1029 = vmatprep.subr.mxu0 %v428
    %1030 = vmatpush1.msra.mxu0 %v427
    %1031 = vmatprep.subr.mxu0 %v432
    %1032 = vmatpush1.msra.mxu0 %v431
    %1033 = vmatprep.subr.mxu0 %v436
    %1034 = vmatpush1.msra.mxu0 %v435
    %1035 = vmatprep.subr.mxu0 %v440
    %1036 = vmatpush1.msra.mxu0 %v439
    %1037 = vmatprep.subr.mxu0 %v444
    %1038 = vmatpush1.msra.mxu0 %v443
    %1039 = vmatprep.subr.mxu0 %v448
    %1040 = vmatpush1.msra.mxu0 %v447
    %1041 = vmatprep.subr.mxu0 %v452
    %1042 = vmatpush1.msra.mxu0 %v451
    %1043 = vmatprep.subr.mxu0 %v456
    %1044 = vmatpush1.msra.mxu0 %v455
    %1045 = vmatprep.subr.mxu0 %v460
    %1046 = vmatpush1.msra.mxu0 %v459
    %1047 = vmatprep.subr.mxu0 %v464
    %1048 = vmatpush1.msra.mxu0 %v463
    %1049 = vmatprep.subr.mxu0 %v468
    %1050 = vmatpush1.msra.mxu0 %v467
    %1051 = vmatprep.subr.mxu0 %v472
    %1052 = vmatpush1.msra.mxu0 %v471
    %1053 = vmatprep.subr.mxu0 %v476
    %1054 = vmatpush1.msra.mxu0 %v475
    %1055 = vmatprep.subr.mxu0 %v480
    %1056 = vmatpush1.msra.mxu0 %v479
    %1057 = vmatprep.subr.mxu0 %v484
    %1058 = vmatpush1.msra.mxu0 %v483
    %1059 = vmatprep.mubr.f32.mxu0 %v921
    %1060 = vmatmul.mubr.f32.gmra.mrb[0].mxu0 %v920
    %v1061 = vpop.f32.mrb[0].mxu0
    %v1062 = vadd.f32 %v498, %v1061
    %v1063 = vpop.f32.mrb[0].mxu0
    %v1064 = vadd.f32 %v502, %v1063
    %1065 = vdwg.mxu0
    %v1066 = vmax.f32 %v991, 0.0
    %v1067 = vmax.f32 %v993, 0.0
    %v1068 = vmax.f32 %v1062, 0.0
    %v1069 = vmax.f32 %v1064, 0.0
    %v1070 = vld [vmem:[%s2] sm:$0xff]
    %v1071 = vld [vmem:[%s2 + $0x8] sm:$0xff]
    %v1072 = vld [vmem:[%s2 + $0x10] sm:$0xff]
    %v1073 = vld [vmem:[%s2 + $0x18] sm:$0xff]
    %v1074 = vld [vmem:[%s2 + $0x20] sm:$0xff]
    %v1075 = vld [vmem:[%s2 + $0x28] sm:$0xff]
    %v1076 = vld [vmem:[%s2 + $0x30] sm:$0xff]
    %v1077 = vld [vmem:[%s2 + $0x38] sm:$0xff]
    %v1078 = vld [vmem:[%s2 + $0x40] sm:$0xff]
    %v1079 = vld [vmem:[%s2 + $0x48] sm:$0xff]
    %v1080 = vld [vmem:[%s2 + $0x50] sm:$0xff]
    %v1081 = vld [vmem:[%s2 + $0x58] sm:$0xff]
    %v1082 = vld [vmem:[%s2 + $0x60] sm:$0xff]
    %v1083 = vld [vmem:[%s2 + $0x68] sm:$0xff]
    %v1084 = vld [vmem:[%s2 + $0x70] sm:$0xff]
    %v1085 = vld [vmem:[%s2 + $0x78] sm:$0xff]
    %v1086 = vld [vmem:[%s2 + $0x80] sm:$0xff]
    %v1087 = vld [vmem:[%s2 + $0x88] sm:$0xff]
    %v1088 = vld [vmem:[%s2 + $0x90] sm:$0xff]
    %v1089 = vld [vmem:[%s2 + $0x98] sm:$0xff]
    %v1090 = vld [vmem:[%s2 + $0xa0] sm:$0xff]
    %v1091 = vld [vmem:[%s2 + $0xa8] sm:$0xff]
    %v1092 = vld [vmem:[%s2 + $0xb0] sm:$0xff]
    %v1093 = vld [vmem:[%s2 + $0xb8] sm:$0xff]
    %v1094 = vld [vmem:[%s2 + $0xc0] sm:$0xff]
    %v1095 = vld [vmem:[%s2 + $0xc8] sm:$0xff]
    %v1096 = vld [vmem:[%s2 + $0xd0] sm:$0xff]
    %v1097 = vld [vmem:[%s2 + $0xd8] sm:$0xff]
    %v1098 = vld [vmem:[%s2 + $0xe0] sm:$0xff]
    %v1099 = vld [vmem:[%s2 + $0xe8] sm:$0xff]
    %v1100 = vld [vmem:[%s2 + $0xf0] sm:$0xff]
    %v1101 = vld [vmem:[%s2 + $0xf8] sm:$0xff]
    %v1102 = vld [vmem:[%s2 + $0x100] sm:$0xff]
    %v1103 = vld [vmem:[%s2 + $0x108] sm:$0xff]
    %v1104 = vld [vmem:[%s2 + $0x110] sm:$0xff]
    %v1105 = vld [vmem:[%s2 + $0x118] sm:$0xff]
    %v1106 = vld [vmem:[%s2 + $0x120] sm:$0xff]
    %v1107 = vld [vmem:[%s2 + $0x128] sm:$0xff]
    %v1108 = vld [vmem:[%s2 + $0x130] sm:$0xff]
    %v1109 = vld [vmem:[%s2 + $0x138] sm:$0xff]
    %v1110 = vld [vmem:[%s2 + $0x140] sm:$0xff]
    %v1111 = vld [vmem:[%s2 + $0x148] sm:$0xff]
    %v1112 = vld [vmem:[%s2 + $0x150] sm:$0xff]
    %v1113 = vld [vmem:[%s2 + $0x158] sm:$0xff]
    %v1114 = vld [vmem:[%s2 + $0x160] sm:$0xff]
    %v1115 = vld [vmem:[%s2 + $0x168] sm:$0xff]
    %v1116 = vld [vmem:[%s2 + $0x170] sm:$0xff]
    %v1117 = vld [vmem:[%s2 + $0x178] sm:$0xff]
    %v1118 = vld [vmem:[%s2 + $0x180] sm:$0xff]
    %v1119 = vld [vmem:[%s2 + $0x188] sm:$0xff]
    %v1120 = vld [vmem:[%s2 + $0x190] sm:$0xff]
    %v1121 = vld [vmem:[%s2 + $0x198] sm:$0xff]
    %v1122 = vld [vmem:[%s2 + $0x1a0] sm:$0xff]
    %v1123 = vld [vmem:[%s2 + $0x1a8] sm:$0xff]
    %v1124 = vld [vmem:[%s2 + $0x1b0] sm:$0xff]
    %v1125 = vld [vmem:[%s2 + $0x1b8] sm:$0xff]
    %v1126 = vld [vmem:[%s2 + $0x1c0] sm:$0xff]
    %v1127 = vld [vmem:[%s2 + $0x1c8] sm:$0xff]
    %v1128 = vld [vmem:[%s2 + $0x1d0] sm:$0xff]
    %v1129 = vld [vmem:[%s2 + $0x1d8] sm:$0xff]
    %v1130 = vld [vmem:[%s2 + $0x1e0] sm:$0xff]
    %v1131 = vld [vmem:[%s2 + $0x1e8] sm:$0xff]
    %v1132 = vld [vmem:[%s2 + $0x1f0] sm:$0xff]
    %v1133 = vld [vmem:[%s2 + $0x1f8] sm:$0xff]
    %v1134 = vld [vmem:[%s4] sm:$0x1]
    %v1136 = vlaneseq
    %v1137 = vshrl.u32 %v1136, 7
    %v1138 = vsub.s32 0, %v1137
    %v1139 = vrot.slane %v1134, %v1138
    %1141 = vmatprep.subr.mxu0 0.0
    %1142 = vmatpush1.msra.mxu0 %v1070
    %1143 = vmatprep.subr.mxu0 0.0
    %1144 = vmatpush1.msra.mxu0 %v1071
    %1145 = vmatprep.subr.mxu0 0.0
    %1146 = vmatpush1.msra.mxu0 %v1072
    %1147 = vmatprep.subr.mxu0 0.0
    %1148 = vmatpush1.msra.mxu0 %v1073
    %1149 = vmatprep.subr.mxu0 0.0
    %1150 = vmatpush1.msra.mxu0 %v1074
    %1151 = vmatprep.subr.mxu0 0.0
    %1152 = vmatpush1.msra.mxu0 %v1075
    %1153 = vmatprep.subr.mxu0 0.0
    %1154 = vmatpush1.msra.mxu0 %v1076
    %1155 = vmatprep.subr.mxu0 0.0
    %1156 = vmatpush1.msra.mxu0 %v1077
    %1157 = vmatprep.subr.mxu0 0.0
    %1158 = vmatpush1.msra.mxu0 %v1078
    %1159 = vmatprep.subr.mxu0 0.0
    %1160 = vmatpush1.msra.mxu0 %v1079
    %1161 = vmatprep.subr.mxu0 0.0
    %1162 = vmatpush1.msra.mxu0 %v1080
    %1163 = vmatprep.subr.mxu0 0.0
    %1164 = vmatpush1.msra.mxu0 %v1081
    %1165 = vmatprep.subr.mxu0 0.0
    %1166 = vmatpush1.msra.mxu0 %v1082
    %1167 = vmatprep.subr.mxu0 0.0
    %1168 = vmatpush1.msra.mxu0 %v1083
    %1169 = vmatprep.subr.mxu0 0.0
    %1170 = vmatpush1.msra.mxu0 %v1084
    %1171 = vmatprep.subr.mxu0 0.0
    %1172 = vmatpush1.msra.mxu0 %v1085
    %1173 = vmatprep.subr.mxu0 0.0
    %1174 = vmatpush1.msra.mxu0 %v1086
    %1175 = vmatprep.subr.mxu0 0.0
    %1176 = vmatpush1.msra.mxu0 %v1087
    %1177 = vmatprep.subr.mxu0 0.0
    %1178 = vmatpush1.msra.mxu0 %v1088
    %1179 = vmatprep.subr.mxu0 0.0
    %1180 = vmatpush1.msra.mxu0 %v1089
    %1181 = vmatprep.subr.mxu0 0.0
    %1182 = vmatpush1.msra.mxu0 %v1090
    %1183 = vmatprep.subr.mxu0 0.0
    %1184 = vmatpush1.msra.mxu0 %v1091
    %1185 = vmatprep.subr.mxu0 0.0
    %1186 = vmatpush1.msra.mxu0 %v1092
    %1187 = vmatprep.subr.mxu0 0.0
    %1188 = vmatpush1.msra.mxu0 %v1093
    %1189 = vmatprep.subr.mxu0 0.0
    %1190 = vmatpush1.msra.mxu0 %v1094
    %1191 = vmatprep.subr.mxu0 0.0
    %1192 = vmatpush1.msra.mxu0 %v1095
    %1193 = vmatprep.subr.mxu0 0.0
    %1194 = vmatpush1.msra.mxu0 %v1096
    %1195 = vmatprep.subr.mxu0 0.0
    %1196 = vmatpush1.msra.mxu0 %v1097
    %1197 = vmatprep.subr.mxu0 0.0
    %1198 = vmatpush1.msra.mxu0 %v1098
    %1199 = vmatprep.subr.mxu0 0.0
    %1200 = vmatpush1.msra.mxu0 %v1099
    %1201 = vmatprep.subr.mxu0 0.0
    %1202 = vmatpush1.msra.mxu0 %v1100
    %1203 = vmatprep.subr.mxu0 0.0
    %1204 = vmatpush1.msra.mxu0 %v1101
    %1205 = vmatprep.mubr.f32.mxu0 %v1067
    %1206 = vmatmul.mubr.f32.gmra.mrb[0].mxu0 %v1066
    %v1207 = vpop.f32.mrb[0].mxu0
    %v1208 = vadd.f32 %v1139, %v1207
    %v1209 = vpop.f32.mrb[0].mxu0
    %1210 = vdwg.mxu0
    %1211 = vmatprep.subr.mxu0 0.0
    %1212 = vmatpush1.msra.mxu0 %v1102
    %1213 = vmatprep.subr.mxu0 0.0
    %1214 = vmatpush1.msra.mxu0 %v1103
    %1215 = vmatprep.subr.mxu0 0.0
    %1216 = vmatpush1.msra.mxu0 %v1104
    %1217 = vmatprep.subr.mxu0 0.0
    %1218 = vmatpush1.msra.mxu0 %v1105
    %1219 = vmatprep.subr.mxu0 0.0
    %1220 = vmatpush1.msra.mxu0 %v1106
    %1221 = vmatprep.subr.mxu0 0.0
    %1222 = vmatpush1.msra.mxu0 %v1107
    %1223 = vmatprep.subr.mxu0 0.0
    %1224 = vmatpush1.msra.mxu0 %v1108
    %1225 = vmatprep.subr.mxu0 0.0
    %1226 = vmatpush1.msra.mxu0 %v1109
    %1227 = vmatprep.subr.mxu0 0.0
    %1228 = vmatpush1.msra.mxu0 %v1110
    %1229 = vmatprep.subr.mxu0 0.0
    %1230 = vmatpush1.msra.mxu0 %v1111
    %1231 = vmatprep.subr.mxu0 0.0
    %1232 = vmatpush1.msra.mxu0 %v1112
    %1233 = vmatprep.subr.mxu0 0.0
    %1234 = vmatpush1.msra.mxu0 %v1113
    %1235 = vmatprep.subr.mxu0 0.0
    %1236 = vmatpush1.msra.mxu0 %v1114
    %1237 = vmatprep.subr.mxu0 0.0
    %1238 = vmatpush1.msra.mxu0 %v1115
    %1239 = vmatprep.subr.mxu0 0.0
    %1240 = vmatpush1.msra.mxu0 %v1116
    %1241 = vmatprep.subr.mxu0 0.0
    %1242 = vmatpush1.msra.mxu0 %v1117
    %1243 = vmatprep.subr.mxu0 0.0
    %1244 = vmatpush1.msra.mxu0 %v1118
    %1245 = vmatprep.subr.mxu0 0.0
    %1246 = vmatpush1.msra.mxu0 %v1119
    %1247 = vmatprep.subr.mxu0 0.0
    %1248 = vmatpush1.msra.mxu0 %v1120
    %1249 = vmatprep.subr.mxu0 0.0
    %1250 = vmatpush1.msra.mxu0 %v1121
    %1251 = vmatprep.subr.mxu0 0.0
    %1252 = vmatpush1.msra.mxu0 %v1122
    %1253 = vmatprep.subr.mxu0 0.0
    %1254 = vmatpush1.msra.mxu0 %v1123
    %1255 = vmatprep.subr.mxu0 0.0
    %1256 = vmatpush1.msra.mxu0 %v1124
    %1257 = vmatprep.subr.mxu0 0.0
    %1258 = vmatpush1.msra.mxu0 %v1125
    %1259 = vmatprep.subr.mxu0 0.0
    %1260 = vmatpush1.msra.mxu0 %v1126
    %1261 = vmatprep.subr.mxu0 0.0
    %1262 = vmatpush1.msra.mxu0 %v1127
    %1263 = vmatprep.subr.mxu0 0.0
    %1264 = vmatpush1.msra.mxu0 %v1128
    %1265 = vmatprep.subr.mxu0 0.0
    %1266 = vmatpush1.msra.mxu0 %v1129
    %1267 = vmatprep.subr.mxu0 0.0
    %1268 = vmatpush1.msra.mxu0 %v1130
    %1269 = vmatprep.subr.mxu0 0.0
    %1270 = vmatpush1.msra.mxu0 %v1131
    %1271 = vmatprep.subr.mxu0 0.0
    %1272 = vmatpush1.msra.mxu0 %v1132
    %1273 = vmatprep.subr.mxu0 0.0
    %1274 = vmatpush1.msra.mxu0 %v1133
    %1275 = vmatprep.mubr.f32.mxu0 %v1069
    %1276 = vmatmul.mubr.f32.gmra.mrb[0].mxu0 %v1068
    %v1277 = vpop.f32.mrb[0].mxu0
    %v1278 = vadd.f32 %v1208, %v1277
    %v1279 = vpop.f32.mrb[0].mxu0
    %1280 = vdwg.mxu0
    %1281 = vst [vmem:[#allocation5] sm:$0x3] %v1278
    // Predicated region
    $region26: #{tpu_custom_call.1} parent=1 // pred_check
      _
    $region27: #{tpu_custom_call.1} parent=1 // pred_check_branch
      %1283 = sbr.rel (0) target = $region29
    $region28: #{tpu_custom_call.1} parent=1 // pred_region
      %s1285 = ssub.s32 32, 32
      %1286 = vsyncadd [#allocation4], %s1285
      %s1288 = sshll.u32 [#allocation5], 4
      %s1289 = int_to_ptr.vmem [resolvable:$true] %s1288
      %1291 = dma.vmem_to_hbm [thread:$0]  %s1289, 32, %s5, [#allocation4]
    $region29: #{tpu_custom_call.1} parent=1 // pred_fallthru
      _
    // Predicated region
    $region30: #{tpu_custom_call.1} parent=1 // pred_check
      _
    $region31: #{tpu_custom_call.1} parent=1 // pred_check_branch
      %1293 = sbr.rel (0) target = $region33
    $region32: #{tpu_custom_call.1} parent=1 // pred_region
      %1294 = dma.done [#allocation4], 32
    $region33: #{tpu_custom_call.1} parent=1 // pred_fallthru
      _
    %1295 = vsyncpa [#allocation3], 1
    %1296 = vsyncpa [#allocation4], 1

// kernel: tpu_custom_call.1
$region0: #{tpu_custom_call.1}
  #allocation0 [shape = 'u32[]', space=smem, size = 0x4, offset = 0x4, fixed_abs, tag = 'smem constant byte address 0x4 - core index']
  #allocation1 [shape = 'u32[144,128]{1,0:T(1,128)}', space=vmem, size = 0x12000, scoped, tag = 'internal scratch']
  %s0 = inlined_call_operand.vmem [shape: f32[2,256,64], index: 0, kind: input, shape index: {}]
  %s1 = inlined_call_operand.hbm [shape: f32[256,512], index: 1, kind: input, shape index: {}]
  %s2 = inlined_call_operand.vmem [shape: f32[512,128], index: 2, kind: input, shape index: {}]
  %s3 = inlined_call_operand.vmem [shape: f32[1,512], index: 3, kind: input, shape index: {}]
  %s4 = inlined_call_operand.vmem [shape: f32[1,128], index: 4, kind: input, shape index: {}]
  %s5 = inlined_call_operand.hbm [shape: f32[2,128], index: 5, kind: output, shape index: {}]
  %s6 = sld [smem:[#allocation0]]
  $region34: #{tpu_custom_call.1} parent=0
    _
  %s8 = ssub.s32 1, %s6
  %s9 = scalar_select 0, %s8, %s6
  $region1: #{tpu_custom_call.1} parent=0
    #allocation2 [shape = 'u8[524288]{0}', space=vmem, size = 0x80000, scoped, tag = 'input window, operand 1, single buffered']
    #allocation3 [shape = 's32[1]{0}', space=sflag, size = 0x4, scoped, tag = 'scoped memory for tpu_custom_call.1']
    #allocation4 [shape = 's32[1]{0}', space=sflag, size = 0x4, scoped, tag = 'scoped memory for tpu_custom_call.1']
    #allocation5 [shape = 'u8[1024]{0}', space=vmem, size = 0x400, scoped, tag = 'output window, operand 0, single buffered']
    %10 = vsyncpa [#allocation3], 0
    %11 = vsyncpa [#allocation4], 0
    // Predicated region
    $region2: #{tpu_custom_call.1} parent=1 // pred_check
      _
    $region3: #{tpu_custom_call.1} parent=1 // pred_check_branch
      %13 = sbr.rel (0) target = $region5
    $region4: #{tpu_custom_call.1} parent=1 // pred_region
      _
    $region5: #{tpu_custom_call.1} parent=1 // pred_fallthru
      _
    // Predicated region
    $region6: #{tpu_custom_call.1} parent=1 // pred_check
      _
    $region7: #{tpu_custom_call.1} parent=1 // pred_check_branch
      %15 = sbr.rel (0) target = $region9
    $region8: #{tpu_custom_call.1} parent=1 // pred_region
      %s17 = ssub.s32 16384, 16384
      %18 = vsyncadd [#allocation3], %s17
      %s19 = sshll.u32 [#allocation2], 4
      %s20 = int_to_ptr.vmem [resolvable:$true] %s19
      %25 = dma.hbm_to_vmem [thread:$0]  %s1, 16384, %s20, [#allocation3], 512, 512, 32
    $region9: #{tpu_custom_call.1} parent=1 // pred_fallthru
      _
    // Predicated region
    $region10: #{tpu_custom_call.1} parent=1 // pred_check
      _
    $region11: #{tpu_custom_call.1} parent=1 // pred_check_branch
      %27 = sbr.rel (0) target = $region13
    $region12: #{tpu_custom_call.1} parent=1 // pred_region
      _
    $region13: #{tpu_custom_call.1} parent=1 // pred_fallthru
      _
    // Predicated region
    $region14: #{tpu_custom_call.1} parent=1 // pred_check
      _
    $region15: #{tpu_custom_call.1} parent=1 // pred_check_branch
      %29 = sbr.rel (0) target = $region17
    $region16: #{tpu_custom_call.1} parent=1 // pred_region
      _
    $region17: #{tpu_custom_call.1} parent=1 // pred_fallthru
      _
    // Predicated region
    $region18: #{tpu_custom_call.1} parent=1 // pred_check
      _
    $region19: #{tpu_custom_call.1} parent=1 // pred_check_branch
      %31 = sbr.rel (0) target = $region21
    $region20: #{tpu_custom_call.1} parent=1 // pred_region
      _
    $region21: #{tpu_custom_call.1} parent=1 // pred_fallthru
      _
    // Predicated region
    $region22: #{tpu_custom_call.1} parent=1 // pred_check
      _
    $region23: #{tpu_custom_call.1} parent=1 // pred_check_branch
      %33 = sbr.rel (0) target = $region25
    $region24: #{tpu_custom_call.1} parent=1 // pred_region
      %34 = dma.done [#allocation3], 16384
    $region25: #{tpu_custom_call.1} parent=1 // pred_fallthru
      _
    %v35 = vld [vmem:[%s0] sm:$0xff]
    %v36 = vld [vmem:[%s0 + $0x8] sm:$0xff]
    %v37 = vld [vmem:[%s0 + $0x10] sm:$0xff]
    %v38 = vld [vmem:[%s0 + $0x18] sm:$0xff]
    %v39 = vld [vmem:[%s0 + $0x20] sm:$0xff]
    %v40 = vld [vmem:[%s0 + $0x28] sm:$0xff]
    %v41 = vld [vmem:[%s0 + $0x30] sm:$0xff]
    %v42 = vld [vmem:[%s0 + $0x38] sm:$0xff]
    %v43 = vld [vmem:[%s0 + $0x40] sm:$0xff]
    %v44 = vld [vmem:[%s0 + $0x48] sm:$0xff]
    %v45 = vld [vmem:[%s0 + $0x50] sm:$0xff]
    %v46 = vld [vmem:[%s0 + $0x58] sm:$0xff]
    %v47 = vld [vmem:[%s0 + $0x60] sm:$0xff]
    %v48 = vld [vmem:[%s0 + $0x68] sm:$0xff]
    %v49 = vld [vmem:[%s0 + $0x70] sm:$0xff]
    %v50 = vld [vmem:[%s0 + $0x78] sm:$0xff]
    %v51 = vld [vmem:[%s0 + $0x80] sm:$0xff]
    %v52 = vld [vmem:[%s0 + $0x88] sm:$0xff]
    %v53 = vld [vmem:[%s0 + $0x90] sm:$0xff]
    %v54 = vld [vmem:[%s0 + $0x98] sm:$0xff]
    %v55 = vld [vmem:[%s0 + $0xa0] sm:$0xff]
    %v56 = vld [vmem:[%s0 + $0xa8] sm:$0xff]
    %v57 = vld [vmem:[%s0 + $0xb0] sm:$0xff]
    %v58 = vld [vmem:[%s0 + $0xb8] sm:$0xff]
    %v59 = vld [vmem:[%s0 + $0xc0] sm:$0xff]
    %v60 = vld [vmem:[%s0 + $0xc8] sm:$0xff]
    %v61 = vld [vmem:[%s0 + $0xd0] sm:$0xff]
    %v62 = vld [vmem:[%s0 + $0xd8] sm:$0xff]
    %v63 = vld [vmem:[%s0 + $0xe0] sm:$0xff]
    %v64 = vld [vmem:[%s0 + $0xe8] sm:$0xff]
    %v65 = vld [vmem:[%s0 + $0xf0] sm:$0xff]
    %v66 = vld [vmem:[%s0 + $0xf8] sm:$0xff]
    %v67 = vld [vmem:[%s0 + $0x100] sm:$0xff]
    %v68 = vld [vmem:[%s0 + $0x108] sm:$0xff]
    %v69 = vld [vmem:[%s0 + $0x110] sm:$0xff]
    %v70 = vld [vmem:[%s0 + $0x118] sm:$0xff]
    %v71 = vld [vmem:[%s0 + $0x120] sm:$0xff]
    %v72 = vld [vmem:[%s0 + $0x128] sm:$0xff]
    %v73 = vld [vmem:[%s0 + $0x130] sm:$0xff]
    %v74 = vld [vmem:[%s0 + $0x138] sm:$0xff]
    %v75 = vld [vmem:[%s0 + $0x140] sm:$0xff]
    %v76 = vld [vmem:[%s0 + $0x148] sm:$0xff]
    %v77 = vld [vmem:[%s0 + $0x150] sm:$0xff]
    %v78 = vld [vmem:[%s0 + $0x158] sm:$0xff]
    %v79 = vld [vmem:[%s0 + $0x160] sm:$0xff]
    %v80 = vld [vmem:[%s0 + $0x168] sm:$0xff]
    %v81 = vld [vmem:[%s0 + $0x170] sm:$0xff]
    %v82 = vld [vmem:[%s0 + $0x178] sm:$0xff]
    %v83 = vld [vmem:[%s0 + $0x180] sm:$0xff]
    %v84 = vld [vmem:[%s0 + $0x188] sm:$0xff]
    %v85 = vld [vmem:[%s0 + $0x190] sm:$0xff]
    %v86 = vld [vmem:[%s0 + $0x198] sm:$0xff]
    %v87 = vld [vmem:[%s0 + $0x1a0] sm:$0xff]
    %v88 = vld [vmem:[%s0 + $0x1a8] sm:$0xff]
    %v89 = vld [vmem:[%s0 + $0x1b0] sm:$0xff]
    %v90 = vld [vmem:[%s0 + $0x1b8] sm:$0xff]
    %v91 = vld [vmem:[%s0 + $0x1c0] sm:$0xff]
    %v92 = vld [vmem:[%s0 + $0x1c8] sm:$0xff]
    %v93 = vld [vmem:[%s0 + $0x1d0] sm:$0xff]
    %v94 = vld [vmem:[%s0 + $0x1d8] sm:$0xff]
    %v95 = vld [vmem:[%s0 + $0x1e0] sm:$0xff]
    %v96 = vld [vmem:[%s0 + $0x1e8] sm:$0xff]
    %v97 = vld [vmem:[%s0 + $0x1f0] sm:$0xff]
    %v98 = vld [vmem:[%s0 + $0x1f8] sm:$0xff]
    %vm99 = vcmask 523264
    %v100 = vsel %vm99, %v35, 0.0
    %101 = vadd.xlane.f32.xlu0 %v100
    %v102 = vpop.xlane.xlu0 %101
    %v103 = vsel %vm99, %v36, 0.0
    %104 = vadd.xlane.f32.xlu0 %v103
    %v105 = vpop.xlane.xlu0 %104
    %v106 = vsel %vm99, %v37, 0.0
    %107 = vadd.xlane.f32.xlu0 %v106
    %v108 = vpop.xlane.xlu0 %107
    %v109 = vsel %vm99, %v38, 0.0
    %110 = vadd.xlane.f32.xlu0 %v109
    %v111 = vpop.xlane.xlu0 %110
    %v112 = vsel %vm99, %v39, 0.0
    %113 = vadd.xlane.f32.xlu0 %v112
    %v114 = vpop.xlane.xlu0 %113
    %v115 = vsel %vm99, %v40, 0.0
    %116 = vadd.xlane.f32.xlu0 %v115
    %v117 = vpop.xlane.xlu0 %116
    %v118 = vsel %vm99, %v41, 0.0
    %119 = vadd.xlane.f32.xlu0 %v118
    %v120 = vpop.xlane.xlu0 %119
    %v121 = vsel %vm99, %v42, 0.0
    %122 = vadd.xlane.f32.xlu0 %v121
    %v123 = vpop.xlane.xlu0 %122
    %v124 = vsel %vm99, %v43, 0.0
    %125 = vadd.xlane.f32.xlu0 %v124
    %v126 = vpop.xlane.xlu0 %125
    %v127 = vsel %vm99, %v44, 0.0
    %128 = vadd.xlane.f32.xlu0 %v127
    %v129 = vpop.xlane.xlu0 %128
    %v130 = vsel %vm99, %v45, 0.0
    %131 = vadd.xlane.f32.xlu0 %v130
    %v132 = vpop.xlane.xlu0 %131
    %v133 = vsel %vm99, %v46, 0.0
    %134 = vadd.xlane.f32.xlu0 %v133
    %v135 = vpop.xlane.xlu0 %134
    %v136 = vsel %vm99, %v47, 0.0
    %137 = vadd.xlane.f32.xlu0 %v136
    %v138 = vpop.xlane.xlu0 %137
    %v139 = vsel %vm99, %v48, 0.0
    %140 = vadd.xlane.f32.xlu0 %v139
    %v141 = vpop.xlane.xlu0 %140
    %v142 = vsel %vm99, %v49, 0.0
    %143 = vadd.xlane.f32.xlu0 %v142
    %v144 = vpop.xlane.xlu0 %143
    %v145 = vsel %vm99, %v50, 0.0
    %146 = vadd.xlane.f32.xlu0 %v145
    %v147 = vpop.xlane.xlu0 %146
    %v148 = vsel %vm99, %v51, 0.0
    %149 = vadd.xlane.f32.xlu0 %v148
    %v150 = vpop.xlane.xlu0 %149
    %v151 = vsel %vm99, %v52, 0.0
    %152 = vadd.xlane.f32.xlu0 %v151
    %v153 = vpop.xlane.xlu0 %152
    %v154 = vsel %vm99, %v53, 0.0
    %155 = vadd.xlane.f32.xlu0 %v154
    %v156 = vpop.xlane.xlu0 %155
    %v157 = vsel %vm99, %v54, 0.0
    %158 = vadd.xlane.f32.xlu0 %v157
    %v159 = vpop.xlane.xlu0 %158
    %v160 = vsel %vm99, %v55, 0.0
    %161 = vadd.xlane.f32.xlu0 %v160
    %v162 = vpop.xlane.xlu0 %161
    %v163 = vsel %vm99, %v56, 0.0
    %164 = vadd.xlane.f32.xlu0 %v163
    %v165 = vpop.xlane.xlu0 %164
    %v166 = vsel %vm99, %v57, 0.0
    %167 = vadd.xlane.f32.xlu0 %v166
    %v168 = vpop.xlane.xlu0 %167
    %v169 = vsel %vm99, %v58, 0.0
    %170 = vadd.xlane.f32.xlu0 %v169
    %v171 = vpop.xlane.xlu0 %170
    %v172 = vsel %vm99, %v59, 0.0
    %173 = vadd.xlane.f32.xlu0 %v172
    %v174 = vpop.xlane.xlu0 %173
    %v175 = vsel %vm99, %v60, 0.0
    %176 = vadd.xlane.f32.xlu0 %v175
    %v177 = vpop.xlane.xlu0 %176
    %v178 = vsel %vm99, %v61, 0.0
    %179 = vadd.xlane.f32.xlu0 %v178
    %v180 = vpop.xlane.xlu0 %179
    %v181 = vsel %vm99, %v62, 0.0
    %182 = vadd.xlane.f32.xlu0 %v181
    %v183 = vpop.xlane.xlu0 %182
    %v184 = vsel %vm99, %v63, 0.0
    %185 = vadd.xlane.f32.xlu0 %v184
    %v186 = vpop.xlane.xlu0 %185
    %v187 = vsel %vm99, %v64, 0.0
    %188 = vadd.xlane.f32.xlu0 %v187
    %v189 = vpop.xlane.xlu0 %188
    %v190 = vsel %vm99, %v65, 0.0
    %191 = vadd.xlane.f32.xlu0 %v190
    %v192 = vpop.xlane.xlu0 %191
    %v193 = vsel %vm99, %v66, 0.0
    %194 = vadd.xlane.f32.xlu0 %v193
    %v195 = vpop.xlane.xlu0 %194
    %v196 = vsel %vm99, %v67, 0.0
    %197 = vadd.xlane.f32.xlu0 %v196
    %v198 = vpop.xlane.xlu0 %197
    %v199 = vsel %vm99, %v68, 0.0
    %200 = vadd.xlane.f32.xlu0 %v199
    %v201 = vpop.xlane.xlu0 %200
    %v202 = vsel %vm99, %v69, 0.0
    %203 = vadd.xlane.f32.xlu0 %v202
    %v204 = vpop.xlane.xlu0 %203
    %v205 = vsel %vm99, %v70, 0.0
    %206 = vadd.xlane.f32.xlu0 %v205
    %v207 = vpop.xlane.xlu0 %206
    %v208 = vsel %vm99, %v71, 0.0
    %209 = vadd.xlane.f32.xlu0 %v208
    %v210 = vpop.xlane.xlu0 %209
    %v211 = vsel %vm99, %v72, 0.0
    %212 = vadd.xlane.f32.xlu0 %v211
    %v213 = vpop.xlane.xlu0 %212
    %v214 = vsel %vm99, %v73, 0.0
    %215 = vadd.xlane.f32.xlu0 %v214
    %v216 = vpop.xlane.xlu0 %215
    %v217 = vsel %vm99, %v74, 0.0
    %218 = vadd.xlane.f32.xlu0 %v217
    %v219 = vpop.xlane.xlu0 %218
    %v220 = vsel %vm99, %v75, 0.0
    %221 = vadd.xlane.f32.xlu0 %v220
    %v222 = vpop.xlane.xlu0 %221
    %v223 = vsel %vm99, %v76, 0.0
    %224 = vadd.xlane.f32.xlu0 %v223
    %v225 = vpop.xlane.xlu0 %224
    %v226 = vsel %vm99, %v77, 0.0
    %227 = vadd.xlane.f32.xlu0 %v226
    %v228 = vpop.xlane.xlu0 %227
    %v229 = vsel %vm99, %v78, 0.0
    %230 = vadd.xlane.f32.xlu0 %v229
    %v231 = vpop.xlane.xlu0 %230
    %v232 = vsel %vm99, %v79, 0.0
    %233 = vadd.xlane.f32.xlu0 %v232
    %v234 = vpop.xlane.xlu0 %233
    %v235 = vsel %vm99, %v80, 0.0
    %236 = vadd.xlane.f32.xlu0 %v235
    %v237 = vpop.xlane.xlu0 %236
    %v238 = vsel %vm99, %v81, 0.0
    %239 = vadd.xlane.f32.xlu0 %v238
    %v240 = vpop.xlane.xlu0 %239
    %v241 = vsel %vm99, %v82, 0.0
    %242 = vadd.xlane.f32.xlu0 %v241
    %v243 = vpop.xlane.xlu0 %242
    %v244 = vsel %vm99, %v83, 0.0
    %245 = vadd.xlane.f32.xlu0 %v244
    %v246 = vpop.xlane.xlu0 %245
    %v247 = vsel %vm99, %v84, 0.0
    %248 = vadd.xlane.f32.xlu0 %v247
    %v249 = vpop.xlane.xlu0 %248
    %v250 = vsel %vm99, %v85, 0.0
    %251 = vadd.xlane.f32.xlu0 %v250
    %v252 = vpop.xlane.xlu0 %251
    %v253 = vsel %vm99, %v86, 0.0
    %254 = vadd.xlane.f32.xlu0 %v253
    %v255 = vpop.xlane.xlu0 %254
    %v256 = vsel %vm99, %v87, 0.0
    %257 = vadd.xlane.f32.xlu0 %v256
    %v258 = vpop.xlane.xlu0 %257
    %v259 = vsel %vm99, %v88, 0.0
    %260 = vadd.xlane.f32.xlu0 %v259
    %v261 = vpop.xlane.xlu0 %260
    %v262 = vsel %vm99, %v89, 0.0
    %263 = vadd.xlane.f32.xlu0 %v262
    %v264 = vpop.xlane.xlu0 %263
    %v265 = vsel %vm99, %v90, 0.0
    %266 = vadd.xlane.f32.xlu0 %v265
    %v267 = vpop.xlane.xlu0 %266
    %v268 = vsel %vm99, %v91, 0.0
    %269 = vadd.xlane.f32.xlu0 %v268
    %v270 = vpop.xlane.xlu0 %269
    %v271 = vsel %vm99, %v92, 0.0
    %272 = vadd.xlane.f32.xlu0 %v271
    %v273 = vpop.xlane.xlu0 %272
    %v274 = vsel %vm99, %v93, 0.0
    %275 = vadd.xlane.f32.xlu0 %v274
    %v276 = vpop.xlane.xlu0 %275
    %v277 = vsel %vm99, %v94, 0.0
    %278 = vadd.xlane.f32.xlu0 %v277
    %v279 = vpop.xlane.xlu0 %278
    %v280 = vsel %vm99, %v95, 0.0
    %281 = vadd.xlane.f32.xlu0 %v280
    %v282 = vpop.xlane.xlu0 %281
    %v283 = vsel %vm99, %v96, 0.0
    %284 = vadd.xlane.f32.xlu0 %v283
    %v285 = vpop.xlane.xlu0 %284
    %v286 = vsel %vm99, %v97, 0.0
    %287 = vadd.xlane.f32.xlu0 %v286
    %v288 = vpop.xlane.xlu0 %287
    %v289 = vsel %vm99, %v98, 0.0
    %290 = vadd.xlane.f32.xlu0 %v289
    %v291 = vpop.xlane.xlu0 %290
    %v292 = vrcp.pop 64.0
    %v293 = vmul.f32 %v102, %v292
    %v294 = vmul.f32 %v105, %v292
    %v295 = vmul.f32 %v108, %v292
    %v296 = vmul.f32 %v111, %v292
    %v297 = vmul.f32 %v114, %v292
    %v298 = vmul.f32 %v117, %v292
    %v299 = vmul.f32 %v120, %v292
    %v300 = vmul.f32 %v123, %v292
    %v301 = vmul.f32 %v126, %v292
    %v302 = vmul.f32 %v129, %v292
    %v303 = vmul.f32 %v132, %v292
    %v304 = vmul.f32 %v135, %v292
    %v305 = vmul.f32 %v138, %v292
    %v306 = vmul.f32 %v141, %v292
    %v307 = vmul.f32 %v144, %v292
    %v308 = vmul.f32 %v147, %v292
    %v309 = vmul.f32 %v150, %v292
    %v310 = vmul.f32 %v153, %v292
    %v311 = vmul.f32 %v156, %v292
    %v312 = vmul.f32 %v159, %v292
    %v313 = vmul.f32 %v162, %v292
    %v314 = vmul.f32 %v165, %v292
    %v315 = vmul.f32 %v168, %v292
    %v316 = vmul.f32 %v171, %v292
    %v317 = vmul.f32 %v174, %v292
    %v318 = vmul.f32 %v177, %v292
    %v319 = vmul.f32 %v180, %v292
    %v320 = vmul.f32 %v183, %v292
    %v321 = vmul.f32 %v186, %v292
    %v322 = vmul.f32 %v189, %v292
    %v323 = vmul.f32 %v192, %v292
    %v324 = vmul.f32 %v195, %v292
    %v325 = vmul.f32 %v198, %v292
    %v326 = vmul.f32 %v201, %v292
    %v327 = vmul.f32 %v204, %v292
    %v328 = vmul.f32 %v207, %v292
    %v329 = vmul.f32 %v210, %v292
    %v330 = vmul.f32 %v213, %v292
    %v331 = vmul.f32 %v216, %v292
    %v332 = vmul.f32 %v219, %v292
    %v333 = vmul.f32 %v222, %v292
    %v334 = vmul.f32 %v225, %v292
    %v335 = vmul.f32 %v228, %v292
    %v336 = vmul.f32 %v231, %v292
    %v337 = vmul.f32 %v234, %v292
    %v338 = vmul.f32 %v237, %v292
    %v339 = vmul.f32 %v240, %v292
    %v340 = vmul.f32 %v243, %v292
    %v341 = vmul.f32 %v246, %v292
    %v342 = vmul.f32 %v249, %v292
    %v343 = vmul.f32 %v252, %v292
    %v344 = vmul.f32 %v255, %v292
    %v345 = vmul.f32 %v258, %v292
    %v346 = vmul.f32 %v261, %v292
    %v347 = vmul.f32 %v264, %v292
    %v348 = vmul.f32 %v267, %v292
    %v349 = vmul.f32 %v270, %v292
    %v350 = vmul.f32 %v273, %v292
    %v351 = vmul.f32 %v276, %v292
    %v352 = vmul.f32 %v279, %v292
    %v353 = vmul.f32 %v282, %v292
    %v354 = vmul.f32 %v285, %v292
    %v355 = vmul.f32 %v288, %v292
    %v356 = vmul.f32 %v291, %v292
    %v357 = vld [vmem:[#allocation2] sm:$0xff]
    %v358 = vld [vmem:[#allocation2 + $0x8] sm:$0xff]
    %v359 = vld [vmem:[#allocation2 + $0x10] sm:$0xff]
    %v360 = vld [vmem:[#allocation2 + $0x18] sm:$0xff]
    %v361 = vld [vmem:[#allocation2 + $0x20] sm:$0xff]
    %v362 = vld [vmem:[#allocation2 + $0x28] sm:$0xff]
    %v363 = vld [vmem:[#allocation2 + $0x30] sm:$0xff]
    %v364 = vld [vmem:[#allocation2 + $0x38] sm:$0xff]
    %v365 = vld [vmem:[#allocation2 + $0x40] sm:$0xff]
    %v366 = vld [vmem:[#allocation2 + $0x48] sm:$0xff]
    %v367 = vld [vmem:[#allocation2 + $0x50] sm:$0xff]
    %v368 = vld [vmem:[#allocation2 + $0x58] sm:$0xff]
    %v369 = vld [vmem:[#allocation2 + $0x60] sm:$0xff]
    %v370 = vld [vmem:[#allocation2 + $0x68] sm:$0xff]
    %v371 = vld [vmem:[#allocation2 + $0x70] sm:$0xff]
    %v372 = vld [vmem:[#allocation2 + $0x78] sm:$0xff]
    %v373 = vld [vmem:[#allocation2 + $0x80] sm:$0xff]
    %v374 = vld [vmem:[#allocation2 + $0x88] sm:$0xff]
    %v375 = vld [vmem:[#allocation2 + $0x90] sm:$0xff]
    %v376 = vld [vmem:[#allocation2 + $0x98] sm:$0xff]
    %v377 = vld [vmem:[#allocation2 + $0xa0] sm:$0xff]
    %v378 = vld [vmem:[#allocation2 + $0xa8] sm:$0xff]
    %v379 = vld [vmem:[#allocation2 + $0xb0] sm:$0xff]
    %v380 = vld [vmem:[#allocation2 + $0xb8] sm:$0xff]
    %v381 = vld [vmem:[#allocation2 + $0xc0] sm:$0xff]
    %v382 = vld [vmem:[#allocation2 + $0xc8] sm:$0xff]
    %v383 = vld [vmem:[#allocation2 + $0xd0] sm:$0xff]
    %v384 = vld [vmem:[#allocation2 + $0xd8] sm:$0xff]
    %v385 = vld [vmem:[#allocation2 + $0xe0] sm:$0xff]
    %v386 = vld [vmem:[#allocation2 + $0xe8] sm:$0xff]
    %v387 = vld [vmem:[#allocation2 + $0xf0] sm:$0xff]
    %v388 = vld [vmem:[#allocation2 + $0xf8] sm:$0xff]
    %v389 = vld [vmem:[#allocation2 + $0x100] sm:$0xff]
    %v390 = vld [vmem:[#allocation2 + $0x108] sm:$0xff]
    %v391 = vld [vmem:[#allocation2 + $0x110] sm:$0xff]
    %v392 = vld [vmem:[#allocation2 + $0x118] sm:$0xff]
    %v393 = vld [vmem:[#allocation2 + $0x120] sm:$0xff]
    %v394 = vld [vmem:[#allocation2 + $0x128] sm:$0xff]
    %v395 = vld [vmem:[#allocation2 + $0x130] sm:$0xff]
    %v396 = vld [vmem:[#allocation2 + $0x138] sm:$0xff]
    %v397 = vld [vmem:[#allocation2 + $0x140] sm:$0xff]
    %v398 = vld [vmem:[#allocation2 + $0x148] sm:$0xff]
    %v399 = vld [vmem:[#allocation2 + $0x150] sm:$0xff]
    %v400 = vld [vmem:[#allocation2 + $0x158] sm:$0xff]
    %v401 = vld [vmem:[#allocation2 + $0x160] sm:$0xff]
    %v402 = vld [vmem:[#allocation2 + $0x168] sm:$0xff]
    %v403 = vld [vmem:[#allocation2 + $0x170] sm:$0xff]
    %v404 = vld [vmem:[#allocation2 + $0x178] sm:$0xff]
    %v405 = vld [vmem:[#allocation2 + $0x180] sm:$0xff]
    %v406 = vld [vmem:[#allocation2 + $0x188] sm:$0xff]
    %v407 = vld [vmem:[#allocation2 + $0x190] sm:$0xff]
    %v408 = vld [vmem:[#allocation2 + $0x198] sm:$0xff]
    %v409 = vld [vmem:[#allocation2 + $0x1a0] sm:$0xff]
    %v410 = vld [vmem:[#allocation2 + $0x1a8] sm:$0xff]
    %v411 = vld [vmem:[#allocation2 + $0x1b0] sm:$0xff]
    %v412 = vld [vmem:[#allocation2 + $0x1b8] sm:$0xff]
    %v413 = vld [vmem:[#allocation2 + $0x1c0] sm:$0xff]
    %v414 = vld [vmem:[#allocation2 + $0x1c8] sm:$0xff]
    %v415 = vld [vmem:[#allocation2 + $0x1d0] sm:$0xff]
    %v416 = vld [vmem:[#allocation2 + $0x1d8] sm:$0xff]
    %v417 = vld [vmem:[#allocation2 + $0x1e0] sm:$0xff]
    %v418 = vld [vmem:[#allocation2 + $0x1e8] sm:$0xff]
    %v419 = vld [vmem:[#allocation2 + $0x1f0] sm:$0xff]
    %v420 = vld [vmem:[#allocation2 + $0x1f8] sm:$0xff]
    %v421 = vld [vmem:[#allocation2 + $0x200] sm:$0xff]
    %v422 = vld [vmem:[#allocation2 + $0x208] sm:$0xff]
    %v423 = vld [vmem:[#allocation2 + $0x210] sm:$0xff]
    %v424 = vld [vmem:[#allocation2 + $0x218] sm:$0xff]
    %v425 = vld [vmem:[#allocation2 + $0x220] sm:$0xff]
    %v426 = vld [vmem:[#allocation2 + $0x228] sm:$0xff]
    %v427 = vld [vmem:[#allocation2 + $0x230] sm:$0xff]
    %v428 = vld [vmem:[#allocation2 + $0x238] sm:$0xff]
    %v429 = vld [vmem:[#allocation2 + $0x240] sm:$0xff]
    %v430 = vld [vmem:[#allocation2 + $0x248] sm:$0xff]
    %v431 = vld [vmem:[#allocation2 + $0x250] sm:$0xff]
    %v432 = vld [vmem:[#allocation2 + $0x258] sm:$0xff]
    %v433 = vld [vmem:[#allocation2 + $0x260] sm:$0xff]
    %v434 = vld [vmem:[#allocation2 + $0x268] sm:$0xff]
    %v435 = vld [vmem:[#allocation2 + $0x270] sm:$0xff]
    %v436 = vld [vmem:[#allocation2 + $0x278] sm:$0xff]
    %v437 = vld [vmem:[#allocation2 + $0x280] sm:$0xff]
    %v438 = vld [vmem:[#allocation2 + $0x288] sm:$0xff]
    %v439 = vld [vmem:[#allocation2 + $0x290] sm:$0xff]
    %v440 = vld [vmem:[#allocation2 + $0x298] sm:$0xff]
    %v441 = vld [vmem:[#allocation2 + $0x2a0] sm:$0xff]
    %v442 = vld [vmem:[#allocation2 + $0x2a8] sm:$0xff]
    %v443 = vld [vmem:[#allocation2 + $0x2b0] sm:$0xff]
    %v444 = vld [vmem:[#allocation2 + $0x2b8] sm:$0xff]
    %v445 = vld [vmem:[#allocation2 + $0x2c0] sm:$0xff]
    %v446 = vld [vmem:[#allocation2 + $0x2c8] sm:$0xff]
    %v447 = vld [vmem:[#allocation2 + $0x2d0] sm:$0xff]
    %v448 = vld [vmem:[#allocation2 + $0x2d8] sm:$0xff]
    %v449 = vld [vmem:[#allocation2 + $0x2e0] sm:$0xff]
    %v450 = vld [vmem:[#allocation2 + $0x2e8] sm:$0xff]
    %v451 = vld [vmem:[#allocation2 + $0x2f0] sm:$0xff]
    %v452 = vld [vmem:[#allocation2 + $0x2f8] sm:$0xff]
    %v453 = vld [vmem:[#allocation2 + $0x300] sm:$0xff]
    %v454 = vld [vmem:[#allocation2 + $0x308] sm:$0xff]
    %v455 = vld [vmem:[#allocation2 + $0x310] sm:$0xff]
    %v456 = vld [vmem:[#allocation2 + $0x318] sm:$0xff]
    %v457 = vld [vmem:[#allocation2 + $0x320] sm:$0xff]
    %v458 = vld [vmem:[#allocation2 + $0x328] sm:$0xff]
    %v459 = vld [vmem:[#allocation2 + $0x330] sm:$0xff]
    %v460 = vld [vmem:[#allocation2 + $0x338] sm:$0xff]
    %v461 = vld [vmem:[#allocation2 + $0x340] sm:$0xff]
    %v462 = vld [vmem:[#allocation2 + $0x348] sm:$0xff]
    %v463 = vld [vmem:[#allocation2 + $0x350] sm:$0xff]
    %v464 = vld [vmem:[#allocation2 + $0x358] sm:$0xff]
    %v465 = vld [vmem:[#allocation2 + $0x360] sm:$0xff]
    %v466 = vld [vmem:[#allocation2 + $0x368] sm:$0xff]
    %v467 = vld [vmem:[#allocation2 + $0x370] sm:$0xff]
    %v468 = vld [vmem:[#allocation2 + $0x378] sm:$0xff]
    %v469 = vld [vmem:[#allocation2 + $0x380] sm:$0xff]
    %v470 = vld [vmem:[#allocation2 + $0x388] sm:$0xff]
    %v471 = vld [vmem:[#allocation2 + $0x390] sm:$0xff]
    %v472 = vld [vmem:[#allocation2 + $0x398] sm:$0xff]
    %v473 = vld [vmem:[#allocation2 + $0x3a0] sm:$0xff]
    %v474 = vld [vmem:[#allocation2 + $0x3a8] sm:$0xff]
    %v475 = vld [vmem:[#allocation2 + $0x3b0] sm:$0xff]
    %v476 = vld [vmem:[#allocation2 + $0x3b8] sm:$0xff]
    %v477 = vld [vmem:[#allocation2 + $0x3c0] sm:$0xff]
    %v478 = vld [vmem:[#allocation2 + $0x3c8] sm:$0xff]
    %v479 = vld [vmem:[#allocation2 + $0x3d0] sm:$0xff]
    %v480 = vld [vmem:[#allocation2 + $0x3d8] sm:$0xff]
    %v481 = vld [vmem:[#allocation2 + $0x3e0] sm:$0xff]
    %v482 = vld [vmem:[#allocation2 + $0x3e8] sm:$0xff]
    %v483 = vld [vmem:[#allocation2 + $0x3f0] sm:$0xff]
    %v484 = vld [vmem:[#allocation2 + $0x3f8] sm:$0xff]
    %v485 = vld [vmem:[%s3] sm:$0xf]
    %v487 = vlaneseq
    %v488 = vshrl.u32 %v487, 7
    %v489 = vsub.s32 0, %v488
    %v490 = vrot.slane %v485, %v489
    %v491 = vlaneseq
    %v492 = vshrl.u32 %v491, 7
    %v493 = vsub.s32 1, %v492
    %v494 = vrot.slane %v485, %v493
    %v495 = vlaneseq
    %v496 = vshrl.u32 %v495, 7
    %v497 = vsub.s32 2, %v496
    %v498 = vrot.slane %v485, %v497
    %v499 = vlaneseq
    %v500 = vshrl.u32 %v499, 7
    %v501 = vsub.s32 3, %v500
    %v502 = vrot.slane %v485, %v501
    %v571 = vlaneseq
    %v572 = vand.u32 %v571, 127
    %v573 = vlaneseq
    %v574 = vshrl.u32 %v573, 7
    %v575 = vsub.s32 %v572, %v574
    %v576 = vrot.slane %v293, %v575
    %v577 = vadd.s32 %v572, 4294967288
    %v578 = vlaneseq
    %v579 = vshrl.u32 %v578, 7
    %v580 = vsub.s32 %v577, %v579
    %v581 = vrot.slane %v294, %v580
    %vm582 = vcmask 130112
    %v583 = vsel %vm582, %v581, %v576
    %v584 = vadd.s32 %v572, 4294967280
    %v585 = vlaneseq
    %v586 = vshrl.u32 %v585, 7
    %v587 = vsub.s32 %v584, %v586
    %v588 = vrot.slane %v295, %v587
    %vm589 = vcmask 195712
    %v590 = vsel %vm589, %v588, %v583
    %v591 = vadd.s32 %v572, 4294967272
    %v592 = vlaneseq
    %v593 = vshrl.u32 %v592, 7
    %v594 = vsub.s32 %v591, %v593
    %v595 = vrot.slane %v296, %v594
    %vm596 = vcmask 261312
    %v597 = vsel %vm596, %v595, %v590
    %v598 = vadd.s32 %v572, 4294967264
    %v599 = vlaneseq
    %v600 = vshrl.u32 %v599, 7
    %v601 = vsub.s32 %v598, %v600
    %v602 = vrot.slane %v297, %v601
    %vm603 = vcmask 326912
    %v604 = vsel %vm603, %v602, %v597
    %v605 = vadd.s32 %v572, 4294967256
    %v606 = vlaneseq
    %v607 = vshrl.u32 %v606, 7
    %v608 = vsub.s32 %v605, %v607
    %v609 = vrot.slane %v298, %v608
    %vm610 = vcmask 392512
    %v611 = vsel %vm610, %v609, %v604
    %v612 = vadd.s32 %v572, 4294967248
    %v613 = vlaneseq
    %v614 = vshrl.u32 %v613, 7
    %v615 = vsub.s32 %v612, %v614
    %v616 = vrot.slane %v299, %v615
    %vm617 = vcmask 458112
    %v618 = vsel %vm617, %v616, %v611
    %v619 = vadd.s32 %v572, 4294967240
    %v620 = vlaneseq
    %v621 = vshrl.u32 %v620, 7
    %v622 = vsub.s32 %v619, %v621
    %v623 = vrot.slane %v300, %v622
    %vm624 = vcmask 523712
    %v625 = vsel %vm624, %v623, %v618
    %v626 = vadd.s32 %v572, 4294967232
    %v627 = vlaneseq
    %v628 = vshrl.u32 %v627, 7
    %v629 = vsub.s32 %v626, %v628
    %v630 = vrot.slane %v301, %v629
    %vm631 = vcmask 589312
    %v632 = vsel %vm631, %v630, %v625
    %v633 = vadd.s32 %v572, 4294967224
    %v634 = vlaneseq
    %v635 = vshrl.u32 %v634, 7
    %v636 = vsub.s32 %v633, %v635
    %v637 = vrot.slane %v302, %v636
    %vm638 = vcmask 654912
    %v639 = vsel %vm638, %v637, %v632
    %v640 = vadd.s32 %v572, 4294967216
    %v641 = vlaneseq
    %v642 = vshrl.u32 %v641, 7
    %v643 = vsub.s32 %v640, %v642
    %v644 = vrot.slane %v303, %v643
    %vm645 = vcmask 720512
    %v646 = vsel %vm645, %v644, %v639
    %v647 = vadd.s32 %v572, 4294967208
    %v648 = vlaneseq
    %v649 = vshrl.u32 %v648, 7
    %v650 = vsub.s32 %v647, %v649
    %v651 = vrot.slane %v304, %v650
    %vm652 = vcmask 786112
    %v653 = vsel %vm652, %v651, %v646
    %v654 = vadd.s32 %v572, 4294967200
    %v655 = vlaneseq
    %v656 = vshrl.u32 %v655, 7
    %v657 = vsub.s32 %v654, %v656
    %v658 = vrot.slane %v305, %v657
    %vm659 = vcmask 851712
    %v660 = vsel %vm659, %v658, %v653
    %v661 = vadd.s32 %v572, 4294967192
    %v662 = vlaneseq
    %v663 = vshrl.u32 %v662, 7
    %v664 = vsub.s32 %v661, %v663
    %v665 = vrot.slane %v306, %v664
    %vm666 = vcmask 917312
    %v667 = vsel %vm666, %v665, %v660
    %v668 = vadd.s32 %v572, 4294967184
    %v669 = vlaneseq
    %v670 = vshrl.u32 %v669, 7
    %v671 = vsub.s32 %v668, %v670
    %v672 = vrot.slane %v307, %v671
    %vm673 = vcmask 982912
    %v674 = vsel %vm673, %v672, %v667
    %v675 = vadd.s32 %v572, 4294967176
    %v676 = vlaneseq
    %v677 = vshrl.u32 %v676, 7
    %v678 = vsub.s32 %v675, %v677
    %v679 = vrot.slane %v308, %v678
    %vm680 = vcmask 1048512
    %v681 = vsel %vm680, %v679, %v674
    %v682 = vlaneseq
    %v683 = vshrl.u32 %v682, 7
    %v684 = vsub.s32 %v572, %v683
    %v685 = vrot.slane %v309, %v684
    %v686 = vlaneseq
    %v687 = vshrl.u32 %v686, 7
    %v688 = vsub.s32 %v577, %v687
    %v689 = vrot.slane %v310, %v688
    %v690 = vsel %vm582, %v689, %v685
    %v691 = vlaneseq
    %v692 = vshrl.u32 %v691, 7
    %v693 = vsub.s32 %v584, %v692
    %v694 = vrot.slane %v311, %v693
    %v695 = vsel %vm589, %v694, %v690
    %v696 = vlaneseq
    %v697 = vshrl.u32 %v696, 7
    %v698 = vsub.s32 %v591, %v697
    %v699 = vrot.slane %v312, %v698
    %v700 = vsel %vm596, %v699, %v695
    %v701 = vlaneseq
    %v702 = vshrl.u32 %v701, 7
    %v703 = vsub.s32 %v598, %v702
    %v704 = vrot.slane %v313, %v703
    %v705 = vsel %vm603, %v704, %v700
    %v706 = vlaneseq
    %v707 = vshrl.u32 %v706, 7
    %v708 = vsub.s32 %v605, %v707
    %v709 = vrot.slane %v314, %v708
    %v710 = vsel %vm610, %v709, %v705
    %v711 = vlaneseq
    %v712 = vshrl.u32 %v711, 7
    %v713 = vsub.s32 %v612, %v712
    %v714 = vrot.slane %v315, %v713
    %v715 = vsel %vm617, %v714, %v710
    %v716 = vlaneseq
    %v717 = vshrl.u32 %v716, 7
    %v718 = vsub.s32 %v619, %v717
    %v719 = vrot.slane %v316, %v718
    %v720 = vsel %vm624, %v719, %v715
    %v721 = vlaneseq
    %v722 = vshrl.u32 %v721, 7
    %v723 = vsub.s32 %v626, %v722
    %v724 = vrot.slane %v317, %v723
    %v725 = vsel %vm631, %v724, %v720
    %v726 = vlaneseq
    %v727 = vshrl.u32 %v726, 7
    %v728 = vsub.s32 %v633, %v727
    %v729 = vrot.slane %v318, %v728
    %v730 = vsel %vm638, %v729, %v725
    %v731 = vlaneseq
    %v732 = vshrl.u32 %v731, 7
    %v733 = vsub.s32 %v640, %v732
    %v734 = vrot.slane %v319, %v733
    %v735 = vsel %vm645, %v734, %v730
    %v736 = vlaneseq
    %v737 = vshrl.u32 %v736, 7
    %v738 = vsub.s32 %v647, %v737
    %v739 = vrot.slane %v320, %v738
    %v740 = vsel %vm652, %v739, %v735
    %v741 = vlaneseq
    %v742 = vshrl.u32 %v741, 7
    %v743 = vsub.s32 %v654, %v742
    %v744 = vrot.slane %v321, %v743
    %v745 = vsel %vm659, %v744, %v740
    %v746 = vlaneseq
    %v747 = vshrl.u32 %v746, 7
    %v748 = vsub.s32 %v661, %v747
    %v749 = vrot.slane %v322, %v748
    %v750 = vsel %vm666, %v749, %v745
    %v751 = vlaneseq
    %v752 = vshrl.u32 %v751, 7
    %v753 = vsub.s32 %v668, %v752
    %v754 = vrot.slane %v323, %v753
    %v755 = vsel %vm673, %v754, %v750
    %v756 = vlaneseq
    %v757 = vshrl.u32 %v756, 7
    %v758 = vsub.s32 %v675, %v757
    %v759 = vrot.slane %v324, %v758
    %v760 = vsel %vm680, %v759, %v755
    %v761 = vlaneseq
    %v762 = vshrl.u32 %v761, 7
    %v763 = vsub.s32 %v572, %v762
    %v764 = vrot.slane %v325, %v763
    %v765 = vlaneseq
    %v766 = vshrl.u32 %v765, 7
    %v767 = vsub.s32 %v577, %v766
    %v768 = vrot.slane %v326, %v767
    %v769 = vsel %vm582, %v768, %v764
    %v770 = vlaneseq
    %v771 = vshrl.u32 %v770, 7
    %v772 = vsub.s32 %v584, %v771
    %v773 = vrot.slane %v327, %v772
    %v774 = vsel %vm589, %v773, %v769
    %v775 = vlaneseq
    %v776 = vshrl.u32 %v775, 7
    %v777 = vsub.s32 %v591, %v776
    %v778 = vrot.slane %v328, %v777
    %v779 = vsel %vm596, %v778, %v774
    %v780 = vlaneseq
    %v781 = vshrl.u32 %v780, 7
    %v782 = vsub.s32 %v598, %v781
    %v783 = vrot.slane %v329, %v782
    %v784 = vsel %vm603, %v783, %v779
    %v785 = vlaneseq
    %v786 = vshrl.u32 %v785, 7
    %v787 = vsub.s32 %v605, %v786
    %v788 = vrot.slane %v330, %v787
    %v789 = vsel %vm610, %v788, %v784
    %v790 = vlaneseq
    %v791 = vshrl.u32 %v790, 7
    %v792 = vsub.s32 %v612, %v791
    %v793 = vrot.slane %v331, %v792
    %v794 = vsel %vm617, %v793, %v789
    %v795 = vlaneseq
    %v796 = vshrl.u32 %v795, 7
    %v797 = vsub.s32 %v619, %v796
    %v798 = vrot.slane %v332, %v797
    %v799 = vsel %vm624, %v798, %v794
    %v800 = vlaneseq
    %v801 = vshrl.u32 %v800, 7
    %v802 = vsub.s32 %v626, %v801
    %v803 = vrot.slane %v333, %v802
    %v804 = vsel %vm631, %v803, %v799
    %v805 = vlaneseq
    %v806 = vshrl.u32 %v805, 7
    %v807 = vsub.s32 %v633, %v806
    %v808 = vrot.slane %v334, %v807
    %v809 = vsel %vm638, %v808, %v804
    %v810 = vlaneseq
    %v811 = vshrl.u32 %v810, 7
    %v812 = vsub.s32 %v640, %v811
    %v813 = vrot.slane %v335, %v812
    %v814 = vsel %vm645, %v813, %v809
    %v815 = vlaneseq
    %v816 = vshrl.u32 %v815, 7
    %v817 = vsub.s32 %v647, %v816
    %v818 = vrot.slane %v336, %v817
    %v819 = vsel %vm652, %v818, %v814
    %v820 = vlaneseq
    %v821 = vshrl.u32 %v820, 7
    %v822 = vsub.s32 %v654, %v821
    %v823 = vrot.slane %v337, %v822
    %v824 = vsel %vm659, %v823, %v819
    %v825 = vlaneseq
    %v826 = vshrl.u32 %v825, 7
    %v827 = vsub.s32 %v661, %v826
    %v828 = vrot.slane %v338, %v827
    %v829 = vsel %vm666, %v828, %v824
    %v830 = vlaneseq
    %v831 = vshrl.u32 %v830, 7
    %v832 = vsub.s32 %v668, %v831
    %v833 = vrot.slane %v339, %v832
    %v834 = vsel %vm673, %v833, %v829
    %v835 = vlaneseq
    %v836 = vshrl.u32 %v835, 7
    %v837 = vsub.s32 %v675, %v836
    %v838 = vrot.slane %v340, %v837
    %v839 = vsel %vm680, %v838, %v834
    %v840 = vlaneseq
    %v841 = vshrl.u32 %v840, 7
    %v842 = vsub.s32 %v572, %v841
    %v843 = vrot.slane %v341, %v842
    %v844 = vlaneseq
    %v845 = vshrl.u32 %v844, 7
    %v846 = vsub.s32 %v577, %v845
    %v847 = vrot.slane %v342, %v846
    %v848 = vsel %vm582, %v847, %v843
    %v849 = vlaneseq
    %v850 = vshrl.u32 %v849, 7
    %v851 = vsub.s32 %v584, %v850
    %v852 = vrot.slane %v343, %v851
    %v853 = vsel %vm589, %v852, %v848
    %v854 = vlaneseq
    %v855 = vshrl.u32 %v854, 7
    %v856 = vsub.s32 %v591, %v855
    %v857 = vrot.slane %v344, %v856
    %v858 = vsel %vm596, %v857, %v853
    %v859 = vlaneseq
    %v860 = vshrl.u32 %v859, 7
    %v861 = vsub.s32 %v598, %v860
    %v862 = vrot.slane %v345, %v861
    %v863 = vsel %vm603, %v862, %v858
    %v864 = vlaneseq
    %v865 = vshrl.u32 %v864, 7
    %v866 = vsub.s32 %v605, %v865
    %v867 = vrot.slane %v346, %v866
    %v868 = vsel %vm610, %v867, %v863
    %v869 = vlaneseq
    %v870 = vshrl.u32 %v869, 7
    %v871 = vsub.s32 %v612, %v870
    %v872 = vrot.slane %v347, %v871
    %v873 = vsel %vm617, %v872, %v868
    %v874 = vlaneseq
    %v875 = vshrl.u32 %v874, 7
    %v876 = vsub.s32 %v619, %v875
    %v877 = vrot.slane %v348, %v876
    %v878 = vsel %vm624, %v877, %v873
    %v879 = vlaneseq
    %v880 = vshrl.u32 %v879, 7
    %v881 = vsub.s32 %v626, %v880
    %v882 = vrot.slane %v349, %v881
    %v883 = vsel %vm631, %v882, %v878
    %v884 = vlaneseq
    %v885 = vshrl.u32 %v884, 7
    %v886 = vsub.s32 %v633, %v885
    %v887 = vrot.slane %v350, %v886
    %v888 = vsel %vm638, %v887, %v883
    %v889 = vlaneseq
    %v890 = vshrl.u32 %v889, 7
    %v891 = vsub.s32 %v640, %v890
    %v892 = vrot.slane %v351, %v891
    %v893 = vsel %vm645, %v892, %v888
    %v894 = vlaneseq
    %v895 = vshrl.u32 %v894, 7
    %v896 = vsub.s32 %v647, %v895
    %v897 = vrot.slane %v352, %v896
    %v898 = vsel %vm652, %v897, %v893
    %v899 = vlaneseq
    %v900 = vshrl.u32 %v899, 7
    %v901 = vsub.s32 %v654, %v900
    %v902 = vrot.slane %v353, %v901
    %v903 = vsel %vm659, %v902, %v898
    %v904 = vlaneseq
    %v905 = vshrl.u32 %v904, 7
    %v906 = vsub.s32 %v661, %v905
    %v907 = vrot.slane %v354, %v906
    %v908 = vsel %vm666, %v907, %v903
    %v909 = vlaneseq
    %v910 = vshrl.u32 %v909, 7
    %v911 = vsub.s32 %v668, %v910
    %v912 = vrot.slane %v355, %v911
    %v913 = vsel %vm673, %v912, %v908
    %v914 = vlaneseq
    %v915 = vshrl.u32 %v914, 7
    %v916 = vsub.s32 %v675, %v915
    %v917 = vrot.slane %v356, %v916
    %v918 = vsel %vm680, %v917, %v913
    %vm919 = vcmask 1041409
    %v920 = vsel %vm919, %v839, %v681
    %v921 = vsel %vm919, %v918, %v760
    %924 = vmatprep.subr.mxu0 %v358
    %925 = vmatpush1.msra.mxu0 %v357
    %926 = vmatprep.subr.mxu0 %v362
    %927 = vmatpush1.msra.mxu0 %v361
    %928 = vmatprep.subr.mxu0 %v366
    %929 = vmatpush1.msra.mxu0 %v365
    %930 = vmatprep.subr.mxu0 %v370
    %931 = vmatpush1.msra.mxu0 %v369
    %932 = vmatprep.subr.mxu0 %v374
    %933 = vmatpush1.msra.mxu0 %v373
    %934 = vmatprep.subr.mxu0 %v378
    %935 = vmatpush1.msra.mxu0 %v377
    %936 = vmatprep.subr.mxu0 %v382
    %937 = vmatpush1.msra.mxu0 %v381
    %938 = vmatprep.subr.mxu0 %v386
    %939 = vmatpush1.msra.mxu0 %v385
    %940 = vmatprep.subr.mxu0 %v390
    %941 = vmatpush1.msra.mxu0 %v389
    %942 = vmatprep.subr.mxu0 %v394
    %943 = vmatpush1.msra.mxu0 %v393
    %944 = vmatprep.subr.mxu0 %v398
    %945 = vmatpush1.msra.mxu0 %v397
    %946 = vmatprep.subr.mxu0 %v402
    %947 = vmatpush1.msra.mxu0 %v401
    %948 = vmatprep.subr.mxu0 %v406
    %949 = vmatpush1.msra.mxu0 %v405
    %950 = vmatprep.subr.mxu0 %v410
    %951 = vmatpush1.msra.mxu0 %v409
    %952 = vmatprep.subr.mxu0 %v414
    %953 = vmatpush1.msra.mxu0 %v413
    %954 = vmatprep.subr.mxu0 %v418
    %955 = vmatpush1.msra.mxu0 %v417
    %956 = vmatprep.subr.mxu0 %v422
    %957 = vmatpush1.msra.mxu0 %v421
    %958 = vmatprep.subr.mxu0 %v426
    %959 = vmatpush1.msra.mxu0 %v425
    %960 = vmatprep.subr.mxu0 %v430
    %961 = vmatpush1.msra.mxu0 %v429
    %962 = vmatprep.subr.mxu0 %v434
    %963 = vmatpush1.msra.mxu0 %v433
    %964 = vmatprep.subr.mxu0 %v438
    %965 = vmatpush1.msra.mxu0 %v437
    %966 = vmatprep.subr.mxu0 %v442
    %967 = vmatpush1.msra.mxu0 %v441
    %968 = vmatprep.subr.mxu0 %v446
    %969 = vmatpush1.msra.mxu0 %v445
    %970 = vmatprep.subr.mxu0 %v450
    %971 = vmatpush1.msra.mxu0 %v449
    %972 = vmatprep.subr.mxu0 %v454
    %973 = vmatpush1.msra.mxu0 %v453
    %974 = vmatprep.subr.mxu0 %v458
    %975 = vmatpush1.msra.mxu0 %v457
    %976 = vmatprep.subr.mxu0 %v462
    %977 = vmatpush1.msra.mxu0 %v461
    %978 = vmatprep.subr.mxu0 %v466
    %979 = vmatpush1.msra.mxu0 %v465
    %980 = vmatprep.subr.mxu0 %v470
    %981 = vmatpush1.msra.mxu0 %v469
    %982 = vmatprep.subr.mxu0 %v474
    %983 = vmatpush1.msra.mxu0 %v473
    %984 = vmatprep.subr.mxu0 %v478
    %985 = vmatpush1.msra.mxu0 %v477
    %986 = vmatprep.subr.mxu0 %v482
    %987 = vmatpush1.msra.mxu0 %v481
    %988 = vmatprep.mubr.f32.mxu0 %v921
    %989 = vmatmul.mubr.f32.gmra.mrb[0].mxu0 %v920
    %v990 = vpop.f32.mrb[0].mxu0
    %v991 = vadd.f32 %v490, %v990
    %v992 = vpop.f32.mrb[0].mxu0
    %v993 = vadd.f32 %v494, %v992
    %994 = vdwg.mxu0
    %995 = vmatprep.subr.mxu0 %v360
    %996 = vmatpush1.msra.mxu0 %v359
    %997 = vmatprep.subr.mxu0 %v364
    %998 = vmatpush1.msra.mxu0 %v363
    %999 = vmatprep.subr.mxu0 %v368
    %1000 = vmatpush1.msra.mxu0 %v367
    %1001 = vmatprep.subr.mxu0 %v372
    %1002 = vmatpush1.msra.mxu0 %v371
    %1003 = vmatprep.subr.mxu0 %v376
    %1004 = vmatpush1.msra.mxu0 %v375
    %1005 = vmatprep.subr.mxu0 %v380
    %1006 = vmatpush1.msra.mxu0 %v379
    %1007 = vmatprep.subr.mxu0 %v384
    %1008 = vmatpush1.msra.mxu0 %v383
    %1009 = vmatprep.subr.mxu0 %v388
    %1010 = vmatpush1.msra.mxu0 %v387
    %1011 = vmatprep.subr.mxu0 %v392
    %1012 = vmatpush1.msra.mxu0 %v391
    %1013 = vmatprep.subr.mxu0 %v396
    %1014 = vmatpush1.msra.mxu0 %v395
    %1015 = vmatprep.subr.mxu0 %v400
    %1016 = vmatpush1.msra.mxu0 %v399
    %1017 = vmatprep.subr.mxu0 %v404
    %1018 = vmatpush1.msra.mxu0 %v403
    %1019 = vmatprep.subr.mxu0 %v408
    %1020 = vmatpush1.msra.mxu0 %v407
    %1021 = vmatprep.subr.mxu0 %v412
    %1022 = vmatpush1.msra.mxu0 %v411
    %1023 = vmatprep.subr.mxu0 %v416
    %1024 = vmatpush1.msra.mxu0 %v415
    %1025 = vmatprep.subr.mxu0 %v420
    %1026 = vmatpush1.msra.mxu0 %v419
    %1027 = vmatprep.subr.mxu0 %v424
    %1028 = vmatpush1.msra.mxu0 %v423
    %1029 = vmatprep.subr.mxu0 %v428
    %1030 = vmatpush1.msra.mxu0 %v427
    %1031 = vmatprep.subr.mxu0 %v432
    %1032 = vmatpush1.msra.mxu0 %v431
    %1033 = vmatprep.subr.mxu0 %v436
    %1034 = vmatpush1.msra.mxu0 %v435
    %1035 = vmatprep.subr.mxu0 %v440
    %1036 = vmatpush1.msra.mxu0 %v439
    %1037 = vmatprep.subr.mxu0 %v444
    %1038 = vmatpush1.msra.mxu0 %v443
    %1039 = vmatprep.subr.mxu0 %v448
    %1040 = vmatpush1.msra.mxu0 %v447
    %1041 = vmatprep.subr.mxu0 %v452
    %1042 = vmatpush1.msra.mxu0 %v451
    %1043 = vmatprep.subr.mxu0 %v456
    %1044 = vmatpush1.msra.mxu0 %v455
    %1045 = vmatprep.subr.mxu0 %v460
    %1046 = vmatpush1.msra.mxu0 %v459
    %1047 = vmatprep.subr.mxu0 %v464
    %1048 = vmatpush1.msra.mxu0 %v463
    %1049 = vmatprep.subr.mxu0 %v468
    %1050 = vmatpush1.msra.mxu0 %v467
    %1051 = vmatprep.subr.mxu0 %v472
    %1052 = vmatpush1.msra.mxu0 %v471
    %1053 = vmatprep.subr.mxu0 %v476
    %1054 = vmatpush1.msra.mxu0 %v475
    %1055 = vmatprep.subr.mxu0 %v480
    %1056 = vmatpush1.msra.mxu0 %v479
    %1057 = vmatprep.subr.mxu0 %v484
    %1058 = vmatpush1.msra.mxu0 %v483
    %1059 = vmatprep.mubr.f32.mxu0 %v921
    %1060 = vmatmul.mubr.f32.gmra.mrb[0].mxu0 %v920
    %v1061 = vpop.f32.mrb[0].mxu0
    %v1062 = vadd.f32 %v498, %v1061
    %v1063 = vpop.f32.mrb[0].mxu0
    %v1064 = vadd.f32 %v502, %v1063
    %1065 = vdwg.mxu0
    %v1066 = vmax.f32 %v991, 0.0
    %v1067 = vmax.f32 %v993, 0.0
    %v1068 = vmax.f32 %v1062, 0.0
    %v1069 = vmax.f32 %v1064, 0.0
    %v1070 = vld [vmem:[%s2] sm:$0xff]
    %v1071 = vld [vmem:[%s2 + $0x8] sm:$0xff]
    %v1072 = vld [vmem:[%s2 + $0x10] sm:$0xff]
    %v1073 = vld [vmem:[%s2 + $0x18] sm:$0xff]
    %v1074 = vld [vmem:[%s2 + $0x20] sm:$0xff]
    %v1075 = vld [vmem:[%s2 + $0x28] sm:$0xff]
    %v1076 = vld [vmem:[%s2 + $0x30] sm:$0xff]
    %v1077 = vld [vmem:[%s2 + $0x38] sm:$0xff]
    %v1078 = vld [vmem:[%s2 + $0x40] sm:$0xff]
    %v1079 = vld [vmem:[%s2 + $0x48] sm:$0xff]
    %v1080 = vld [vmem:[%s2 + $0x50] sm:$0xff]
    %v1081 = vld [vmem:[%s2 + $0x58] sm:$0xff]
    %v1082 = vld [vmem:[%s2 + $0x60] sm:$0xff]
    %v1083 = vld [vmem:[%s2 + $0x68] sm:$0xff]
    %v1084 = vld [vmem:[%s2 + $0x70] sm:$0xff]
    %v1085 = vld [vmem:[%s2 + $0x78] sm:$0xff]
    %v1086 = vld [vmem:[%s2 + $0x80] sm:$0xff]
    %v1087 = vld [vmem:[%s2 + $0x88] sm:$0xff]
    %v1088 = vld [vmem:[%s2 + $0x90] sm:$0xff]
    %v1089 = vld [vmem:[%s2 + $0x98] sm:$0xff]
    %v1090 = vld [vmem:[%s2 + $0xa0] sm:$0xff]
    %v1091 = vld [vmem:[%s2 + $0xa8] sm:$0xff]
    %v1092 = vld [vmem:[%s2 + $0xb0] sm:$0xff]
    %v1093 = vld [vmem:[%s2 + $0xb8] sm:$0xff]
    %v1094 = vld [vmem:[%s2 + $0xc0] sm:$0xff]
    %v1095 = vld [vmem:[%s2 + $0xc8] sm:$0xff]
    %v1096 = vld [vmem:[%s2 + $0xd0] sm:$0xff]
    %v1097 = vld [vmem:[%s2 + $0xd8] sm:$0xff]
    %v1098 = vld [vmem:[%s2 + $0xe0] sm:$0xff]
    %v1099 = vld [vmem:[%s2 + $0xe8] sm:$0xff]
    %v1100 = vld [vmem:[%s2 + $0xf0] sm:$0xff]
    %v1101 = vld [vmem:[%s2 + $0xf8] sm:$0xff]
    %v1102 = vld [vmem:[%s2 + $0x100] sm:$0xff]
    %v1103 = vld [vmem:[%s2 + $0x108] sm:$0xff]
    %v1104 = vld [vmem:[%s2 + $0x110] sm:$0xff]
    %v1105 = vld [vmem:[%s2 + $0x118] sm:$0xff]
    %v1106 = vld [vmem:[%s2 + $0x120] sm:$0xff]
    %v1107 = vld [vmem:[%s2 + $0x128] sm:$0xff]
    %v1108 = vld [vmem:[%s2 + $0x130] sm:$0xff]
    %v1109 = vld [vmem:[%s2 + $0x138] sm:$0xff]
    %v1110 = vld [vmem:[%s2 + $0x140] sm:$0xff]
    %v1111 = vld [vmem:[%s2 + $0x148] sm:$0xff]
    %v1112 = vld [vmem:[%s2 + $0x150] sm:$0xff]
    %v1113 = vld [vmem:[%s2 + $0x158] sm:$0xff]
    %v1114 = vld [vmem:[%s2 + $0x160] sm:$0xff]
    %v1115 = vld [vmem:[%s2 + $0x168] sm:$0xff]
    %v1116 = vld [vmem:[%s2 + $0x170] sm:$0xff]
    %v1117 = vld [vmem:[%s2 + $0x178] sm:$0xff]
    %v1118 = vld [vmem:[%s2 + $0x180] sm:$0xff]
    %v1119 = vld [vmem:[%s2 + $0x188] sm:$0xff]
    %v1120 = vld [vmem:[%s2 + $0x190] sm:$0xff]
    %v1121 = vld [vmem:[%s2 + $0x198] sm:$0xff]
    %v1122 = vld [vmem:[%s2 + $0x1a0] sm:$0xff]
    %v1123 = vld [vmem:[%s2 + $0x1a8] sm:$0xff]
    %v1124 = vld [vmem:[%s2 + $0x1b0] sm:$0xff]
    %v1125 = vld [vmem:[%s2 + $0x1b8] sm:$0xff]
    %v1126 = vld [vmem:[%s2 + $0x1c0] sm:$0xff]
    %v1127 = vld [vmem:[%s2 + $0x1c8] sm:$0xff]
    %v1128 = vld [vmem:[%s2 + $0x1d0] sm:$0xff]
    %v1129 = vld [vmem:[%s2 + $0x1d8] sm:$0xff]
    %v1130 = vld [vmem:[%s2 + $0x1e0] sm:$0xff]
    %v1131 = vld [vmem:[%s2 + $0x1e8] sm:$0xff]
    %v1132 = vld [vmem:[%s2 + $0x1f0] sm:$0xff]
    %v1133 = vld [vmem:[%s2 + $0x1f8] sm:$0xff]
    %v1134 = vld [vmem:[%s4] sm:$0x1]
    %v1136 = vlaneseq
    %v1137 = vshrl.u32 %v1136, 7
    %v1138 = vsub.s32 0, %v1137
    %v1139 = vrot.slane %v1134, %v1138
    %1141 = vmatprep.subr.mxu0 0.0
    %1142 = vmatpush1.msra.mxu0 %v1070
    %1143 = vmatprep.subr.mxu0 0.0
    %1144 = vmatpush1.msra.mxu0 %v1071
    %1145 = vmatprep.subr.mxu0 0.0
    %1146 = vmatpush1.msra.mxu0 %v1072
    %1147 = vmatprep.subr.mxu0 0.0
    %1148 = vmatpush1.msra.mxu0 %v1073
    %1149 = vmatprep.subr.mxu0 0.0
    %1150 = vmatpush1.msra.mxu0 %v1074
    %1151 = vmatprep.subr.mxu0 0.0
    %1152 = vmatpush1.msra.mxu0 %v1075
    %1153 = vmatprep.subr.mxu0 0.0
    %1154 = vmatpush1.msra.mxu0 %v1076
    %1155 = vmatprep.subr.mxu0 0.0
    %1156 = vmatpush1.msra.mxu0 %v1077
    %1157 = vmatprep.subr.mxu0 0.0
    %1158 = vmatpush1.msra.mxu0 %v1078
    %1159 = vmatprep.subr.mxu0 0.0
    %1160 = vmatpush1.msra.mxu0 %v1079
    %1161 = vmatprep.subr.mxu0 0.0
    %1162 = vmatpush1.msra.mxu0 %v1080
    %1163 = vmatprep.subr.mxu0 0.0
    %1164 = vmatpush1.msra.mxu0 %v1081
    %1165 = vmatprep.subr.mxu0 0.0
    %1166 = vmatpush1.msra.mxu0 %v1082
    %1167 = vmatprep.subr.mxu0 0.0
    %1168 = vmatpush1.msra.mxu0 %v1083
    %1169 = vmatprep.subr.mxu0 0.0
    %1170 = vmatpush1.msra.mxu0 %v1084
    %1171 = vmatprep.subr.mxu0 0.0
    %1172 = vmatpush1.msra.mxu0 %v1085
    %1173 = vmatprep.subr.mxu0 0.0
    %1174 = vmatpush1.msra.mxu0 %v1086
    %1175 = vmatprep.subr.mxu0 0.0
    %1176 = vmatpush1.msra.mxu0 %v1087
    %1177 = vmatprep.subr.mxu0 0.0
    %1178 = vmatpush1.msra.mxu0 %v1088
    %1179 = vmatprep.subr.mxu0 0.0
    %1180 = vmatpush1.msra.mxu0 %v1089
    %1181 = vmatprep.subr.mxu0 0.0
    %1182 = vmatpush1.msra.mxu0 %v1090
    %1183 = vmatprep.subr.mxu0 0.0
    %1184 = vmatpush1.msra.mxu0 %v1091
    %1185 = vmatprep.subr.mxu0 0.0
    %1186 = vmatpush1.msra.mxu0 %v1092
    %1187 = vmatprep.subr.mxu0 0.0
    %1188 = vmatpush1.msra.mxu0 %v1093
    %1189 = vmatprep.subr.mxu0 0.0
    %1190 = vmatpush1.msra.mxu0 %v1094
    %1191 = vmatprep.subr.mxu0 0.0
    %1192 = vmatpush1.msra.mxu0 %v1095
    %1193 = vmatprep.subr.mxu0 0.0
    %1194 = vmatpush1.msra.mxu0 %v1096
    %1195 = vmatprep.subr.mxu0 0.0
    %1196 = vmatpush1.msra.mxu0 %v1097
    %1197 = vmatprep.subr.mxu0 0.0
    %1198 = vmatpush1.msra.mxu0 %v1098
    %1199 = vmatprep.subr.mxu0 0.0
    %1200 = vmatpush1.msra.mxu0 %v1099
    %1201 = vmatprep.subr.mxu0 0.0
    %1202 = vmatpush1.msra.mxu0 %v1100
    %1203 = vmatprep.subr.mxu0 0.0
    %1204 = vmatpush1.msra.mxu0 %v1101
    %1205 = vmatprep.mubr.f32.mxu0 %v1067
    %1206 = vmatmul.mubr.f32.gmra.mrb[0].mxu0 %v1066
    %v1207 = vpop.f32.mrb[0].mxu0
    %v1208 = vadd.f32 %v1139, %v1207
    %v1209 = vpop.f32.mrb[0].mxu0
    %1210 = vdwg.mxu0
    %1211 = vmatprep.subr.mxu0 0.0
    %1212 = vmatpush1.msra.mxu0 %v1102
    %1213 = vmatprep.subr.mxu0 0.0
    %1214 = vmatpush1.msra.mxu0 %v1103
    %1215 = vmatprep.subr.mxu0 0.0
    %1216 = vmatpush1.msra.mxu0 %v1104
    %1217 = vmatprep.subr.mxu0 0.0
    %1218 = vmatpush1.msra.mxu0 %v1105
    %1219 = vmatprep.subr.mxu0 0.0
    %1220 = vmatpush1.msra.mxu0 %v1106
    %1221 = vmatprep.subr.mxu0 0.0
    %1222 = vmatpush1.msra.mxu0 %v1107
    %1223 = vmatprep.subr.mxu0 0.0
    %1224 = vmatpush1.msra.mxu0 %v1108
    %1225 = vmatprep.subr.mxu0 0.0
    %1226 = vmatpush1.msra.mxu0 %v1109
    %1227 = vmatprep.subr.mxu0 0.0
    %1228 = vmatpush1.msra.mxu0 %v1110
    %1229 = vmatprep.subr.mxu0 0.0
    %1230 = vmatpush1.msra.mxu0 %v1111
    %1231 = vmatprep.subr.mxu0 0.0
    %1232 = vmatpush1.msra.mxu0 %v1112
    %1233 = vmatprep.subr.mxu0 0.0
    %1234 = vmatpush1.msra.mxu0 %v1113
    %1235 = vmatprep.subr.mxu0 0.0
    %1236 = vmatpush1.msra.mxu0 %v1114
    %1237 = vmatprep.subr.mxu0 0.0
    %1238 = vmatpush1.msra.mxu0 %v1115
    %1239 = vmatprep.subr.mxu0 0.0
    %1240 = vmatpush1.msra.mxu0 %v1116
    %1241 = vmatprep.subr.mxu0 0.0
    %1242 = vmatpush1.msra.mxu0 %v1117
    %1243 = vmatprep.subr.mxu0 0.0
    %1244 = vmatpush1.msra.mxu0 %v1118
    %1245 = vmatprep.subr.mxu0 0.0
    %1246 = vmatpush1.msra.mxu0 %v1119
    %1247 = vmatprep.subr.mxu0 0.0
    %1248 = vmatpush1.msra.mxu0 %v1120
    %1249 = vmatprep.subr.mxu0 0.0
    %1250 = vmatpush1.msra.mxu0 %v1121
    %1251 = vmatprep.subr.mxu0 0.0
    %1252 = vmatpush1.msra.mxu0 %v1122
    %1253 = vmatprep.subr.mxu0 0.0
    %1254 = vmatpush1.msra.mxu0 %v1123
    %1255 = vmatprep.subr.mxu0 0.0
    %1256 = vmatpush1.msra.mxu0 %v1124
    %1257 = vmatprep.subr.mxu0 0.0
    %1258 = vmatpush1.msra.mxu0 %v1125
    %1259 = vmatprep.subr.mxu0 0.0
    %1260 = vmatpush1.msra.mxu0 %v1126
    %1261 = vmatprep.subr.mxu0 0.0
    %1262 = vmatpush1.msra.mxu0 %v1127
    %1263 = vmatprep.subr.mxu0 0.0
    %1264 = vmatpush1.msra.mxu0 %v1128
    %1265 = vmatprep.subr.mxu0 0.0
    %1266 = vmatpush1.msra.mxu0 %v1129
    %1267 = vmatprep.subr.mxu0 0.0
    %1268 = vmatpush1.msra.mxu0 %v1130
    %1269 = vmatprep.subr.mxu0 0.0
    %1270 = vmatpush1.msra.mxu0 %v1131
    %1271 = vmatprep.subr.mxu0 0.0
    %1272 = vmatpush1.msra.mxu0 %v1132
    %1273 = vmatprep.subr.mxu0 0.0
    %1274 = vmatpush1.msra.mxu0 %v1133
    %1275 = vmatprep.mubr.f32.mxu0 %v1069
    %1276 = vmatmul.mubr.f32.gmra.mrb[0].mxu0 %v1068
    %v1277 = vpop.f32.mrb[0].mxu0
    %v1278 = vadd.f32 %v1208, %v1277
    %v1279 = vpop.f32.mrb[0].mxu0
    %1280 = vdwg.mxu0
    %1281 = vst [vmem:[#allocation5] sm:$0x3] %v1278
    // Predicated region
    $region26: #{tpu_custom_call.1} parent=1 // pred_check
      _
    $region27: #{tpu_custom_call.1} parent=1 // pred_check_branch
      %1283 = sbr.rel (0) target = $region29
    $region28: #{tpu_custom_call.1} parent=1 // pred_region
      %s1285 = ssub.s32 32, 32
      %1286 = vsyncadd [#allocation4], %s1285
      %s1288 = sshll.u32 [#allocation5], 4
      %s1289 = int_to_ptr.vmem [resolvable:$true] %s1288
      %1291 = dma.vmem_to_hbm [thread:$0]  %s1289, 32, %s5, [#allocation4]
    $region29: #{tpu_custom_call.1} parent=1 // pred_fallthru
      _
    // Predicated region
    $region30: #{tpu_custom_call.1} parent=1 // pred_check
      _
    $region31: #{tpu_custom_call.1} parent=1 // pred_check_branch
      %1293 = sbr.rel (0) target = $region33
    $region32: #{tpu_custom_call.1} parent=1 // pred_region
      %1294 = dma.done [#allocation4], 32
    $region33: #{tpu_custom_call.1} parent=1 // pred_fallthru
      _
    %1295 = vsyncpa [#allocation3], 1
    %1296 = vsyncpa [#allocation4], 1

</llo_original>
